<compile_context>
chip_gen: v6e
topology: v6e:2x2x1
jax: 0.10.0
libtpu: 0.0.40
codegen_flags: <defaults>
</compile_context>

<pallas_src>
import functools

import jax
import jax.numpy as jnp
from jax import lax
from jax.experimental import pallas as pl
from jax.experimental.pallas import tpu as pltpu


def _uvfield_loss_kernel(pts_ref, tex_ref, out_ref,
                         acc_dd, acc_d, acc_uv, acc_pt, acc_m, *,
                         tex_h, tex_w, tex_c, n_total, rgbloss_mode,
                         scinv_lambda, fwd_rgb_weight, fwd_weight, bwd_weight,
                         has_uv_gt):
    step = pl.program_id(0)
    tile_n = pts_ref.shape[0]

    @pl.when(step == 0)
    def _init():
        acc_dd[...] = jnp.zeros_like(acc_dd)
        acc_d[...] = jnp.zeros_like(acc_d)
        acc_uv[...] = jnp.zeros_like(acc_uv)
        acc_pt[...] = jnp.zeros_like(acc_pt)
        acc_m[...] = jnp.zeros_like(acc_m)

    pts = pts_ref[...]                     # (tile_n, 16) packed per-point data
    uv = pts[:, 0:2]
    uv_gt = pts[:, 2:4]
    rgb = pts[:, 4:7]
    surf = pts[:, 7:10]
    u2s = pts[:, 10:13]
    mask = pts[:, 13:14]                   # {0,1}; padded rows are all-zero

    # ---- F.grid_sample(texture, (uv-0.5)*2, bilinear, padding='zeros',
    #      align_corners=False), factorized into separable axis weights ----
    gx = (uv[:, 0:1] - 0.5) * 2.0          # x -> width axis
    gy = (uv[:, 1:2] - 0.5) * 2.0          # y -> height axis
    ix = ((gx + 1.0) * tex_w - 1.0) * 0.5
    iy = ((gy + 1.0) * tex_h - 1.0) * 0.5
    x0f = jnp.floor(ix)
    y0f = jnp.floor(iy)
    tx = ix - x0f
    ty = iy - y0f
    x0 = x0f.astype(jnp.int32)
    y0 = y0f.astype(jnp.int32)

    # Out-of-range corner indices never match the iota column, which
    # reproduces padding_mode='zeros' exactly.
    col_h = lax.broadcasted_iota(jnp.int32, (tile_n, tex_h), 1)
    col_w = lax.broadcasted_iota(jnp.int32, (tile_n, tex_w), 1)
    wy = (jnp.where(col_h == y0, 1.0 - ty, 0.0)
          + jnp.where(col_h == y0 + 1, ty, 0.0))          # (tile_n, H)
    wx = (jnp.where(col_w == x0, 1.0 - tx, 0.0)
          + jnp.where(col_w == x0 + 1, tx, 0.0))          # (tile_n, W)

    # Height blend on the MXU: (tile_n, H) @ (H, C*W) -> (tile_n, C*W).
    rowblend = jnp.dot(wy, tex_ref[...], preferred_element_type=jnp.float32)
    # Width blend per channel: elementwise multiply + lane reduction.
    pred = jnp.concatenate(
        [jnp.sum(wx * rowblend[:, c * tex_w:(c + 1) * tex_w],
                 axis=1, keepdims=True) for c in range(tex_c)], axis=1)

    # ---- un-normalized partial sums (masked rows only) ----
    d = (pred - rgb) * mask                                # (tile_n, 3)
    acc_dd[...] += jnp.sum(d * d, axis=0, keepdims=True)   # per-channel sum d^2
    if rgbloss_mode != 'l2':
        acc_d[...] += jnp.sum(d, axis=0, keepdims=True)    # per-channel sum d
    if has_uv_gt and fwd_weight > 0.0:
        acc_uv[...] += jnp.sum(jnp.abs(uv - uv_gt) * mask, axis=0,
                               keepdims=True)
    dpt = (u2s - surf) * mask
    acc_pt[...] += jnp.sum(dpt * dpt, axis=0, keepdims=True)
    acc_m[...] += jnp.sum(mask, axis=0, keepdims=True)

    # ---- finalize: normalize with GLOBAL counts and emit the losses ----
    @pl.when(step == pl.num_programs(0) - 1)
    def _finalize():
        # NOTE: an all-false object_mask yields NaN, matching the PyTorch
        # module's masked MSELoss on an empty selection.
        m_cnt = jnp.sum(acc_m[...])
        if rgbloss_mode == 'l2':
            uvrgb_loss = jnp.sum(acc_dd[...]) / (m_cnt * 3.0)      # MSE mean
        else:
            di = jnp.sum(acc_dd[...]) / m_cnt
            di2 = (scinv_lambda / (m_cnt * m_cnt)) * jnp.sum(acc_d[...] ** 2)
            uvrgb_loss = di - di2                                  # scale-inv
        loss = fwd_rgb_weight * uvrgb_loss

        uv_loss = jnp.float32(0.0)
        if has_uv_gt and fwd_weight > 0.0:
            uv_loss = jnp.sum(acc_uv[...]) / float(n_total)
            loss = loss + fwd_weight * uv_loss

        pt_loss = jnp.sum(acc_pt[...]) / (m_cnt * 3.0)
        loss = loss + bwd_weight * pt_loss

        lane = lax.broadcasted_iota(jnp.int32, (1, 4), 1)
        out_ref[...] = (jnp.where(lane == 0, loss, 0.0)
                        + jnp.where(lane == 1, uv_loss, 0.0)
                        + jnp.where(lane == 2, pt_loss, 0.0)
                        + jnp.where(lane == 3, uvrgb_loss, 0.0))


def uvfield_loss(uv_outputs, uv_gt, rgbalb_gt, texture_gt, surface_points,
                 uv2surface_points, object_mask, *, fwd_rgb_weight, fwd_weight,
                 bwd_weight, rgbloss='l2', scinv_lambda=0.5, tile_n=512):
    """Glue: pack inputs into kernel layout and call the tiled Pallas kernel."""
    n_pts = uv_outputs.shape[0]
    _, c, h, w = texture_gt.shape
    assert c == 3, "UVFieldLoss assumes a 3-channel texture"
    assert tile_n % 8 == 0

    has_uv_gt = uv_gt is not None
    uv_gt_flat = (uv_gt.reshape(-1, 2) if has_uv_gt
                  else jnp.zeros((n_pts, 2), jnp.float32))

    # texture NCHW (1, C, H, W) -> (H, C*W): channel-major within each row.
    tex_flat = jnp.transpose(texture_gt[0], (1, 0, 2)).reshape(h, c * w)

    # Pack the six skinny per-point tensors into one (N, 16) array.
    packed = jnp.concatenate([
        uv_outputs.reshape(n_pts, 2).astype(jnp.float32),
        uv_gt_flat.astype(jnp.float32),
        rgbalb_gt.reshape(-1, 3).astype(jnp.float32),
        surface_points.reshape(-1, 3).astype(jnp.float32),
        uv2surface_points.reshape(n_pts, 3).astype(jnp.float32),
        object_mask.reshape(n_pts, 1).astype(jnp.float32),
        jnp.zeros((n_pts, 2), jnp.float32),
    ], axis=1)                                              # (N, 16)

    # Pad rows to a multiple of tile_n; padded rows have mask == 0 so they
    # contribute nothing to any accumulated sum.
    n_pad = pl.cdiv(n_pts, tile_n) * tile_n
    if n_pad != n_pts:
        packed = jnp.pad(packed, ((0, n_pad - n_pts), (0, 0)))
    grid = (n_pad // tile_n,)

    kernel = functools.partial(
        _uvfield_loss_kernel, tex_h=h, tex_w=w, tex_c=c, n_total=n_pts,
        rgbloss_mode=rgbloss, scinv_lambda=float(scinv_lambda),
        fwd_rgb_weight=float(fwd_rgb_weight), fwd_weight=float(fwd_weight),
        bwd_weight=float(bwd_weight), has_uv_gt=has_uv_gt)

    out = pl.pallas_call(
        kernel,
        out_shape=jax.ShapeDtypeStruct((1, 4), jnp.float32),
        grid_spec=pltpu.PrefetchScalarGridSpec(
            num_scalar_prefetch=0,
            grid=grid,
            in_specs=[
                pl.BlockSpec((tile_n, 16), lambda i: (i, 0)),   # per-point tile
                pl.BlockSpec((h, c * w), lambda i: (0, 0)),     # resident tex
            ],
            out_specs=pl.BlockSpec((1, 4), lambda i: (0, 0)),   # resident out
            scratch_shapes=[
                pltpu.VMEM((1, 3), jnp.float32),   # sum d^2 per channel
                pltpu.VMEM((1, 3), jnp.float32),   # sum d per channel (scinv)
                pltpu.VMEM((1, 2), jnp.float32),   # sum |uv - uv_gt|
                pltpu.VMEM((1, 3), jnp.float32),   # sum dpt^2
                pltpu.VMEM((1, 1), jnp.float32),   # mask count
            ]),
        compiler_params=pltpu.CompilerParams(
            dimension_semantics=("arbitrary",)),
    )(packed, tex_flat.astype(jnp.float32))

    return {'loss': out[0, 0], 'fwd_loss': out[0, 1],
            'bwd_loss': out[0, 2], 'fwrgb_loss': out[0, 3]}


if __name__ == "__main__":
    key = jax.random.PRNGKey(0)
    k = jax.random.split(key, 7)
    N, C, H, W = 512, 3, 16, 16

    uv_out = jax.random.uniform(k[0], (N, 2), jnp.float32)        # model_outputs['uv_points']
    uv_gt = jax.random.uniform(k[1], (N, 2), jnp.float32)         # ground_truth['uv_gt']
    rgbalb_gt = jax.random.uniform(k[2], (1, N, 3), jnp.float32)  # ground_truth['alb']
    texture_gt = jax.random.uniform(k[3], (1, C, H, W), jnp.float32)  # ground_truth['tex'] (NCHW)
    surface_pts = jax.random.normal(k[4], (1, N, 3), jnp.float32)     # model_inputs['wc']
    uv2surf = jax.random.normal(k[5], (N, 3), jnp.float32)            # model_outputs['uv2surface_points']
    mask = jax.random.uniform(k[6], (N,)) < 0.7                       # model_outputs['object_mask']

    # l2 branch (grid of 4 tiles exercises init/accumulate/finalize).
    res_l2 = uvfield_loss(uv_out, uv_gt, rgbalb_gt, texture_gt, surface_pts,
                          uv2surf, mask, fwd_rgb_weight=1.0, fwd_weight=0.5,
                          bwd_weight=0.25, rgbloss='l2', scinv_lambda=0.5,
                          tile_n=128)
    # scale-invariant branch.
    res_si = uvfield_loss(uv_out, uv_gt, rgbalb_gt, texture_gt, surface_pts,
                          uv2surf, mask, fwd_rgb_weight=1.0, fwd_weight=0.5,
                          bwd_weight=0.25, rgbloss='scinv', scinv_lambda=0.5,
                          tile_n=128)

    jax.block_until_ready(res_l2['loss'])
    jax.block_until_ready(res_si['loss'])
    print("KERNEL_OK")
</pallas_src>

<mosaic_0001>
module attributes {stable_mosaic.version = 11 : i64} {
  func.func @_uvfield_loss_kernel(%arg0: i32, %arg1: memref<128x16xf32, #tpu.memory_space<vmem>>, %arg2: memref<16x48xf32, #tpu.memory_space<vmem>>, %arg3: memref<1x4xf32, #tpu.memory_space<vmem>>, %arg4: memref<1x3xf32, #tpu.memory_space<vmem>>, %arg5: memref<1x3xf32, #tpu.memory_space<vmem>>, %arg6: memref<1x2xf32, #tpu.memory_space<vmem>>, %arg7: memref<1x3xf32, #tpu.memory_space<vmem>>, %arg8: memref<1x1xf32, #tpu.memory_space<vmem>>) attributes {dimension_semantics = [#tpu.dimension_semantics<arbitrary>], iteration_bounds = array<i64: 4>, scalar_prefetch = 0 : i64, scratch_operands = 5 : i64, tpu.core_type = #tpu.core_type<tc>, window_params = [{transform_indices = @transform_0, window_bounds = array<i64: 128, 16>}, {pipeline_mode = #tpu.pipeline_mode<synchronous>, transform_indices = @transform_1, window_bounds = array<i64: 16, 48>}, {pipeline_mode = #tpu.pipeline_mode<synchronous>, transform_indices = @transform_2, window_bounds = array<i64: 1, 4>}]} {
    %c0_i32 = arith.constant 0 : i32
    %0 = arith.cmpi eq, %arg0, %c0_i32 : i32
    %1 = arith.extui %0 : i1 to i32
    %c0_i32_0 = arith.constant 0 : i32
    %2 = arith.cmpi ne, %1, %c0_i32_0 : i32
    scf.if %2 {
      %cst_47 = arith.constant 0.000000e+00 : f32
      %128 = vector.broadcast %cst_47 : f32 to vector<1x3xf32>
      %c0_48 = arith.constant 0 : index
      %c0_49 = arith.constant 0 : index
      %129 = vector.load %arg4[%c0_48, %c0_49] : memref<1x3xf32, #tpu.memory_space<vmem>>, vector<1x3xf32>
      tpu.vector_store %arg4[%c0_48, %c0_49], %128 {strides = array<i32>} : memref<1x3xf32, #tpu.memory_space<vmem>>, vector<1x3xf32>,
      %cst_50 = arith.constant 0.000000e+00 : f32
      %130 = vector.broadcast %cst_50 : f32 to vector<1x3xf32>
      %c0_51 = arith.constant 0 : index
      %c0_52 = arith.constant 0 : index
      %131 = vector.load %arg5[%c0_51, %c0_52] : memref<1x3xf32, #tpu.memory_space<vmem>>, vector<1x3xf32>
      tpu.vector_store %arg5[%c0_51, %c0_52], %130 {strides = array<i32>} : memref<1x3xf32, #tpu.memory_space<vmem>>, vector<1x3xf32>,
      %cst_53 = arith.constant 0.000000e+00 : f32
      %132 = vector.broadcast %cst_53 : f32 to vector<1x2xf32>
      %c0_54 = arith.constant 0 : index
      %c0_55 = arith.constant 0 : index
      %133 = vector.load %arg6[%c0_54, %c0_55] : memref<1x2xf32, #tpu.memory_space<vmem>>, vector<1x2xf32>
      tpu.vector_store %arg6[%c0_54, %c0_55], %132 {strides = array<i32>} : memref<1x2xf32, #tpu.memory_space<vmem>>, vector<1x2xf32>,
      %cst_56 = arith.constant 0.000000e+00 : f32
      %134 = vector.broadcast %cst_56 : f32 to vector<1x3xf32>
      %c0_57 = arith.constant 0 : index
      %c0_58 = arith.constant 0 : index
      %135 = vector.load %arg7[%c0_57, %c0_58] : memref<1x3xf32, #tpu.memory_space<vmem>>, vector<1x3xf32>
      tpu.vector_store %arg7[%c0_57, %c0_58], %134 {strides = array<i32>} : memref<1x3xf32, #tpu.memory_space<vmem>>, vector<1x3xf32>,
      %cst_59 = arith.constant 0.000000e+00 : f32
      %136 = vector.broadcast %cst_59 : f32 to vector<1x1xf32>
      %c0_60 = arith.constant 0 : index
      %c0_61 = arith.constant 0 : index
      %137 = vector.load %arg8[%c0_60, %c0_61] : memref<1x1xf32, #tpu.memory_space<vmem>>, vector<1x1xf32>
      tpu.vector_store %arg8[%c0_60, %c0_61], %136 {strides = array<i32>} : memref<1x1xf32, #tpu.memory_space<vmem>>, vector<1x1xf32>,
    } else {
    }
    %c0 = arith.constant 0 : index
    %c0_1 = arith.constant 0 : index
    %3 = vector.load %arg1[%c0, %c0_1] : memref<128x16xf32, #tpu.memory_space<vmem>>, vector<128x16xf32>
    %4 = vector.extract_strided_slice %3 {offsets = [0, 0], sizes = [128, 2], strides = [1, 1]} : vector<128x16xf32> to vector<128x2xf32>
    %5 = vector.extract_strided_slice %3 {offsets = [0, 2], sizes = [128, 2], strides = [1, 1]} : vector<128x16xf32> to vector<128x2xf32>
    %6 = vector.extract_strided_slice %3 {offsets = [0, 4], sizes = [128, 3], strides = [1, 1]} : vector<128x16xf32> to vector<128x3xf32>
    %7 = vector.extract_strided_slice %3 {offsets = [0, 7], sizes = [128, 3], strides = [1, 1]} : vector<128x16xf32> to vector<128x3xf32>
    %8 = vector.extract_strided_slice %3 {offsets = [0, 10], sizes = [128, 3], strides = [1, 1]} : vector<128x16xf32> to vector<128x3xf32>
    %9 = vector.extract_strided_slice %3 {offsets = [0, 13], sizes = [128, 1], strides = [1, 1]} : vector<128x16xf32> to vector<128x1xf32>
    %10 = vector.extract_strided_slice %4 {offsets = [0, 0], sizes = [128, 1], strides = [1, 1]} : vector<128x2xf32> to vector<128x1xf32>
    %cst = arith.constant 5.000000e-01 : f32
    %11 = vector.broadcast %cst : f32 to vector<128x1xf32>
    %12 = arith.subf %10, %11 : vector<128x1xf32>
    %cst_2 = arith.constant 2.000000e+00 : f32
    %13 = vector.broadcast %cst_2 : f32 to vector<128x1xf32>
    %14 = arith.mulf %12, %13 : vector<128x1xf32>
    %15 = vector.extract_strided_slice %4 {offsets = [0, 1], sizes = [128, 1], strides = [1, 1]} : vector<128x2xf32> to vector<128x1xf32>
    %cst_3 = arith.constant 5.000000e-01 : f32
    %16 = vector.broadcast %cst_3 : f32 to vector<128x1xf32>
    %17 = arith.subf %15, %16 : vector<128x1xf32>
    %cst_4 = arith.constant 2.000000e+00 : f32
    %18 = vector.broadcast %cst_4 : f32 to vector<128x1xf32>
    %19 = arith.mulf %17, %18 : vector<128x1xf32>
    %cst_5 = arith.constant 1.000000e+00 : f32
    %20 = vector.broadcast %cst_5 : f32 to vector<128x1xf32>
    %21 = arith.addf %14, %20 : vector<128x1xf32>
    %cst_6 = arith.constant 1.600000e+01 : f32
    %22 = vector.broadcast %cst_6 : f32 to vector<128x1xf32>
    %23 = arith.mulf %21, %22 : vector<128x1xf32>
    %cst_7 = arith.constant 1.000000e+00 : f32
    %24 = vector.broadcast %cst_7 : f32 to vector<128x1xf32>
    %25 = arith.subf %23, %24 : vector<128x1xf32>
    %cst_8 = arith.constant 5.000000e-01 : f32
    %26 = vector.broadcast %cst_8 : f32 to vector<128x1xf32>
    %27 = arith.mulf %25, %26 : vector<128x1xf32>
    %cst_9 = arith.constant 1.000000e+00 : f32
    %28 = vector.broadcast %cst_9 : f32 to vector<128x1xf32>
    %29 = arith.addf %19, %28 : vector<128x1xf32>
    %cst_10 = arith.constant 1.600000e+01 : f32
    %30 = vector.broadcast %cst_10 : f32 to vector<128x1xf32>
    %31 = arith.mulf %29, %30 : vector<128x1xf32>
    %cst_11 = arith.constant 1.000000e+00 : f32
    %32 = vector.broadcast %cst_11 : f32 to vector<128x1xf32>
    %33 = arith.subf %31, %32 : vector<128x1xf32>
    %cst_12 = arith.constant 5.000000e-01 : f32
    %34 = vector.broadcast %cst_12 : f32 to vector<128x1xf32>
    %35 = arith.mulf %33, %34 : vector<128x1xf32>
    %36 = math.floor %27 : vector<128x1xf32>
    %37 = math.floor %35 : vector<128x1xf32>
    %38 = arith.subf %27, %36 : vector<128x1xf32>
    %39 = arith.subf %35, %37 : vector<128x1xf32>
    %40 = arith.fptosi %36 : vector<128x1xf32> to vector<128x1xi32>
    %41 = arith.fptosi %37 : vector<128x1xf32> to vector<128x1xi32>
    %42 = tpu.iota {dimensions = array<i32: 1>} : vector<128x16xi32>
    %43 = tpu.iota {dimensions = array<i32: 1>} : vector<128x16xi32>
    %44 = vector.broadcast %41 : vector<128x1xi32> to vector<128x16xi32>
    %45 = arith.cmpi eq, %42, %44 : vector<128x16xi32>
    %cst_13 = arith.constant 1.000000e+00 : f32
    %46 = vector.broadcast %cst_13 : f32 to vector<128x1xf32>
    %47 = arith.subf %46, %39 : vector<128x1xf32>
    %cst_14 = arith.constant 0.000000e+00 : f32
    %48 = vector.shape_cast %47 : vector<128x1xf32> to vector<128x1xf32>
    %49 = vector.broadcast %48 : vector<128x1xf32> to vector<128x16xf32>
    %50 = vector.broadcast %cst_14 : f32 to vector<128x16xf32>
    %51 = arith.select %45, %49, %50 : vector<128x16xi1>, vector<128x16xf32>
    %c1_i32 = arith.constant 1 : i32
    %52 = vector.broadcast %c1_i32 : i32 to vector<128x1xi32>
    %53 = arith.addi %41, %52 : vector<128x1xi32>
    %54 = vector.broadcast %53 : vector<128x1xi32> to vector<128x16xi32>
    %55 = arith.cmpi eq, %42, %54 : vector<128x16xi32>
    %cst_15 = arith.constant 0.000000e+00 : f32
    %56 = vector.shape_cast %39 : vector<128x1xf32> to vector<128x1xf32>
    %57 = vector.broadcast %56 : vector<128x1xf32> to vector<128x16xf32>
    %58 = vector.broadcast %cst_15 : f32 to vector<128x16xf32>
    %59 = arith.select %55, %57, %58 : vector<128x16xi1>, vector<128x16xf32>
    %60 = arith.addf %51, %59 : vector<128x16xf32>
    %61 = vector.broadcast %40 : vector<128x1xi32> to vector<128x16xi32>
    %62 = arith.cmpi eq, %43, %61 : vector<128x16xi32>
    %cst_16 = arith.constant 1.000000e+00 : f32
    %63 = vector.broadcast %cst_16 : f32 to vector<128x1xf32>
    %64 = arith.subf %63, %38 : vector<128x1xf32>
    %cst_17 = arith.constant 0.000000e+00 : f32
    %65 = vector.shape_cast %64 : vector<128x1xf32> to vector<128x1xf32>
    %66 = vector.broadcast %65 : vector<128x1xf32> to vector<128x16xf32>
    %67 = vector.broadcast %cst_17 : f32 to vector<128x16xf32>
    %68 = arith.select %62, %66, %67 : vector<128x16xi1>, vector<128x16xf32>
    %c1_i32_18 = arith.constant 1 : i32
    %69 = vector.broadcast %c1_i32_18 : i32 to vector<128x1xi32>
    %70 = arith.addi %40, %69 : vector<128x1xi32>
    %71 = vector.broadcast %70 : vector<128x1xi32> to vector<128x16xi32>
    %72 = arith.cmpi eq, %43, %71 : vector<128x16xi32>
    %cst_19 = arith.constant 0.000000e+00 : f32
    %73 = vector.shape_cast %38 : vector<128x1xf32> to vector<128x1xf32>
    %74 = vector.broadcast %73 : vector<128x1xf32> to vector<128x16xf32>
    %75 = vector.broadcast %cst_19 : f32 to vector<128x16xf32>
    %76 = arith.select %72, %74, %75 : vector<128x16xi1>, vector<128x16xf32>
    %77 = arith.addf %68, %76 : vector<128x16xf32>
    %c0_20 = arith.constant 0 : index
    %c0_21 = arith.constant 0 : index
    %78 = vector.load %arg2[%c0_20, %c0_21] : memref<16x48xf32, #tpu.memory_space<vmem>>, vector<16x48xf32>
    %cst_22 = arith.constant dense<0.000000e+00> : vector<128x48xf32>
    %79 = tpu.matmul %60, %78, %cst_22 {dimension_numbers = #tpu.dot_dimension_numbers<[1], [0], [0], [1], [0, 0, 1, 1], [], []>} : vector<128x16xf32>, vector<16x48xf32>, vector<128x48xf32> -> vector<128x48xf32>
    %80 = vector.extract_strided_slice %79 {offsets = [0, 0], sizes = [128, 16], strides = [1, 1]} : vector<128x48xf32> to vector<128x16xf32>
    %81 = arith.mulf %77, %80 : vector<128x16xf32>
    %cst_23 = arith.constant dense<0.000000e+00> : vector<128xf32>
    %82 = vector.multi_reduction <add>, %81, %cst_23 [1] : vector<128x16xf32> to vector<128xf32>
    %83 = vector.shape_cast %82 : vector<128xf32> to vector<128x1xf32>
    %84 = vector.extract_strided_slice %79 {offsets = [0, 16], sizes = [128, 16], strides = [1, 1]} : vector<128x48xf32> to vector<128x16xf32>
    %85 = arith.mulf %77, %84 : vector<128x16xf32>
    %cst_24 = arith.constant dense<0.000000e+00> : vector<128xf32>
    %86 = vector.multi_reduction <add>, %85, %cst_24 [1] : vector<128x16xf32> to vector<128xf32>
    %87 = vector.shape_cast %86 : vector<128xf32> to vector<128x1xf32>
    %88 = vector.extract_strided_slice %79 {offsets = [0, 32], sizes = [128, 16], strides = [1, 1]} : vector<128x48xf32> to vector<128x16xf32>
    %89 = arith.mulf %77, %88 : vector<128x16xf32>
    %cst_25 = arith.constant dense<0.000000e+00> : vector<128xf32>
    %90 = vector.multi_reduction <add>, %89, %cst_25 [1] : vector<128x16xf32> to vector<128xf32>
    %91 = vector.shape_cast %90 : vector<128xf32> to vector<128x1xf32>
    %92 = tpu.concatenate %83, %87, %91 in 1 : vector<128x1xf32>, vector<128x1xf32>, vector<128x1xf32> -> vector<128x3xf32>
    %93 = arith.subf %92, %6 : vector<128x3xf32>
    %94 = vector.broadcast %9 : vector<128x1xf32> to vector<128x3xf32>
    %95 = arith.mulf %93, %94 : vector<128x3xf32>
    %c0_26 = arith.constant 0 : index
    %c0_27 = arith.constant 0 : index
    %96 = vector.load %arg4[%c0_26, %c0_27] : memref<1x3xf32, #tpu.memory_space<vmem>>, vector<1x3xf32>
    %97 = arith.mulf %95, %95 : vector<128x3xf32>
    %cst_28 = arith.constant dense<0.000000e+00> : vector<3xf32>
    %98 = vector.multi_reduction <add>, %97, %cst_28 [0] : vector<128x3xf32> to vector<3xf32>
    %99 = vector.shape_cast %98 : vector<3xf32> to vector<1x3xf32>
    %100 = arith.addf %96, %99 : vector<1x3xf32>
    %c0_29 = arith.constant 0 : index
    %c0_30 = arith.constant 0 : index
    %101 = vector.load %arg4[%c0_29, %c0_30] : memref<1x3xf32, #tpu.memory_space<vmem>>, vector<1x3xf32>
    tpu.vector_store %arg4[%c0_29, %c0_30], %100 {strides = array<i32>} : memref<1x3xf32, #tpu.memory_space<vmem>>, vector<1x3xf32>,
    %c0_31 = arith.constant 0 : index
    %c0_32 = arith.constant 0 : index
    %102 = vector.load %arg6[%c0_31, %c0_32] : memref<1x2xf32, #tpu.memory_space<vmem>>, vector<1x2xf32>
    %103 = arith.subf %4, %5 : vector<128x2xf32>
    %104 = math.absf %103 : vector<128x2xf32>
    %105 = vector.broadcast %9 : vector<128x1xf32> to vector<128x2xf32>
    %106 = arith.mulf %104, %105 : vector<128x2xf32>
    %cst_33 = arith.constant dense<0.000000e+00> : vector<2xf32>
    %107 = vector.multi_reduction <add>, %106, %cst_33 [0] : vector<128x2xf32> to vector<2xf32>
    %108 = vector.shape_cast %107 : vector<2xf32> to vector<1x2xf32>
    %109 = arith.addf %102, %108 : vector<1x2xf32>
    %c0_34 = arith.constant 0 : index
    %c0_35 = arith.constant 0 : index
    %110 = vector.load %arg6[%c0_34, %c0_35] : memref<1x2xf32, #tpu.memory_space<vmem>>, vector<1x2xf32>
    tpu.vector_store %arg6[%c0_34, %c0_35], %109 {strides = array<i32>} : memref<1x2xf32, #tpu.memory_space<vmem>>, vector<1x2xf32>,
    %111 = arith.subf %8, %7 : vector<128x3xf32>
    %112 = vector.broadcast %9 : vector<128x1xf32> to vector<128x3xf32>
    %113 = arith.mulf %111, %112 : vector<128x3xf32>
    %c0_36 = arith.constant 0 : index
    %c0_37 = arith.constant 0 : index
    %114 = vector.load %arg7[%c0_36, %c0_37] : memref<1x3xf32, #tpu.memory_space<vmem>>, vector<1x3xf32>
    %115 = arith.mulf %113, %113 : vector<128x3xf32>
    %cst_38 = arith.constant dense<0.000000e+00> : vector<3xf32>
    %116 = vector.multi_reduction <add>, %115, %cst_38 [0] : vector<128x3xf32> to vector<3xf32>
    %117 = vector.shape_cast %116 : vector<3xf32> to vector<1x3xf32>
    %118 = arith.addf %114, %117 : vector<1x3xf32>
    %c0_39 = arith.constant 0 : index
    %c0_40 = arith.constant 0 : index
    %119 = vector.load %arg7[%c0_39, %c0_40] : memref<1x3xf32, #tpu.memory_space<vmem>>, vector<1x3xf32>
    tpu.vector_store %arg7[%c0_39, %c0_40], %118 {strides = array<i32>} : memref<1x3xf32, #tpu.memory_space<vmem>>, vector<1x3xf32>,
    %c0_41 = arith.constant 0 : index
    %c0_42 = arith.constant 0 : index
    %120 = vector.load %arg8[%c0_41, %c0_42] : memref<1x1xf32, #tpu.memory_space<vmem>>, vector<1x1xf32>
    %cst_43 = arith.constant dense<0.000000e+00> : vector<1xf32>
    %121 = vector.multi_reduction <add>, %9, %cst_43 [0] : vector<128x1xf32> to vector<1xf32>
    %122 = vector.shape_cast %121 : vector<1xf32> to vector<1x1xf32>
    %123 = arith.addf %120, %122 : vector<1x1xf32>
    %c0_44 = arith.constant 0 : index
    %c0_45 = arith.constant 0 : index
    %124 = vector.load %arg8[%c0_44, %c0_45] : memref<1x1xf32, #tpu.memory_space<vmem>>, vector<1x1xf32>
    tpu.vector_store %arg8[%c0_44, %c0_45], %123 {strides = array<i32>} : memref<1x1xf32, #tpu.memory_space<vmem>>, vector<1x1xf32>,
    %c3_i32 = arith.constant 3 : i32
    %125 = arith.cmpi eq, %arg0, %c3_i32 : i32
    %126 = arith.extui %125 : i1 to i32
    %c0_i32_46 = arith.constant 0 : i32
    %127 = arith.cmpi ne, %126, %c0_i32_46 : i32
    scf.if %127 {
      %c0_47 = arith.constant 0 : index
      %c0_48 = arith.constant 0 : index
      %128 = vector.load %arg8[%c0_47, %c0_48] : memref<1x1xf32, #tpu.memory_space<vmem>>, vector<1x1xf32>
      %129 = vector.shape_cast %128 : vector<1x1xf32> to vector<1x1x1xf32>
      %cst_49 = arith.constant dense<0.000000e+00> : vector<1xf32>
      %130 = vector.multi_reduction <add>, %129, %cst_49 [1, 2] : vector<1x1x1xf32> to vector<1xf32>
      %131 = vector.shape_cast %130 : vector<1xf32> to vector<1x1x1xf32>
      %132 = vector.extract %131[0, 0, 0] : f32 from vector<1x1x1xf32>
      %c0_50 = arith.constant 0 : index
      %c0_51 = arith.constant 0 : index
      %133 = vector.load %arg4[%c0_50, %c0_51] : memref<1x3xf32, #tpu.memory_space<vmem>>, vector<1x3xf32>
      %134 = vector.shape_cast %133 : vector<1x3xf32> to vector<1x1x3xf32>
      %cst_52 = arith.constant dense<0.000000e+00> : vector<1xf32>
      %135 = vector.multi_reduction <add>, %134, %cst_52 [1, 2] : vector<1x1x3xf32> to vector<1xf32>
      %136 = vector.shape_cast %135 : vector<1xf32> to vector<1x1x1xf32>
      %137 = vector.extract %136[0, 0, 0] : f32 from vector<1x1x1xf32>
      %cst_53 = arith.constant 3.000000e+00 : f32
      %138 = arith.mulf %132, %cst_53 : f32
      %139 = arith.divf %137, %138 : f32
      %cst_54 = arith.constant 1.000000e+00 : f32
      %140 = arith.mulf %cst_54, %139 : f32
      %c0_55 = arith.constant 0 : index
      %c0_56 = arith.constant 0 : index
      %141 = vector.load %arg6[%c0_55, %c0_56] : memref<1x2xf32, #tpu.memory_space<vmem>>, vector<1x2xf32>
      %142 = vector.shape_cast %141 : vector<1x2xf32> to vector<1x1x2xf32>
      %cst_57 = arith.constant dense<0.000000e+00> : vector<1xf32>
      %143 = vector.multi_reduction <add>, %142, %cst_57 [1, 2] : vector<1x1x2xf32> to vector<1xf32>
      %144 = vector.shape_cast %143 : vector<1xf32> to vector<1x1x1xf32>
      %145 = vector.extract %144[0, 0, 0] : f32 from vector<1x1x1xf32>
      %cst_58 = arith.constant 5.120000e+02 : f32
      %146 = arith.divf %145, %cst_58 : f32
      %cst_59 = arith.constant 5.000000e-01 : f32
      %147 = arith.mulf %cst_59, %146 : f32
      %148 = arith.addf %140, %147 : f32
      %c0_60 = arith.constant 0 : index
      %c0_61 = arith.constant 0 : index
      %149 = vector.load %arg7[%c0_60, %c0_61] : memref<1x3xf32, #tpu.memory_space<vmem>>, vector<1x3xf32>
      %150 = vector.shape_cast %149 : vector<1x3xf32> to vector<1x1x3xf32>
      %cst_62 = arith.constant dense<0.000000e+00> : vector<1xf32>
      %151 = vector.multi_reduction <add>, %150, %cst_62 [1, 2] : vector<1x1x3xf32> to vector<1xf32>
      %152 = vector.shape_cast %151 : vector<1xf32> to vector<1x1x1xf32>
      %153 = vector.extract %152[0, 0, 0] : f32 from vector<1x1x1xf32>
      %cst_63 = arith.constant 3.000000e+00 : f32
      %154 = arith.mulf %132, %cst_63 : f32
      %155 = arith.divf %153, %154 : f32
      %cst_64 = arith.constant 2.500000e-01 : f32
      %156 = arith.mulf %cst_64, %155 : f32
      %157 = arith.addf %148, %156 : f32
      %158 = tpu.iota {dimensions = array<i32: 1>} : vector<1x4xi32>
      %c0_i32_65 = arith.constant 0 : i32
      %159 = vector.broadcast %c0_i32_65 : i32 to vector<1x4xi32>
      %160 = arith.cmpi eq, %158, %159 : vector<1x4xi32>
      %cst_66 = arith.constant 0.000000e+00 : f32
      %161 = vector.broadcast %157 : f32 to vector<1x4xf32>
      %162 = vector.broadcast %cst_66 : f32 to vector<1x4xf32>
      %163 = arith.select %160, %161, %162 : vector<1x4xi1>, vector<1x4xf32>
      %c1_i32_67 = arith.constant 1 : i32
      %164 = vector.broadcast %c1_i32_67 : i32 to vector<1x4xi32>
      %165 = arith.cmpi eq, %158, %164 : vector<1x4xi32>
      %cst_68 = arith.constant 0.000000e+00 : f32
      %166 = vector.broadcast %146 : f32 to vector<1x4xf32>
      %167 = vector.broadcast %cst_68 : f32 to vector<1x4xf32>
      %168 = arith.select %165, %166, %167 : vector<1x4xi1>, vector<1x4xf32>
      %169 = arith.addf %163, %168 : vector<1x4xf32>
      %c2_i32 = arith.constant 2 : i32
      %170 = vector.broadcast %c2_i32 : i32 to vector<1x4xi32>
      %171 = arith.cmpi eq, %158, %170 : vector<1x4xi32>
      %cst_69 = arith.constant 0.000000e+00 : f32
      %172 = vector.broadcast %155 : f32 to vector<1x4xf32>
      %173 = vector.broadcast %cst_69 : f32 to vector<1x4xf32>
      %174 = arith.select %171, %172, %173 : vector<1x4xi1>, vector<1x4xf32>
      %175 = arith.addf %169, %174 : vector<1x4xf32>
      %c3_i32_70 = arith.constant 3 : i32
      %176 = vector.broadcast %c3_i32_70 : i32 to vector<1x4xi32>
      %177 = arith.cmpi eq, %158, %176 : vector<1x4xi32>
      %cst_71 = arith.constant 0.000000e+00 : f32
      %178 = vector.broadcast %139 : f32 to vector<1x4xf32>
      %179 = vector.broadcast %cst_71 : f32 to vector<1x4xf32>
      %180 = arith.select %177, %178, %179 : vector<1x4xi1>, vector<1x4xf32>
      %181 = arith.addf %175, %180 : vector<1x4xf32>
      %c0_72 = arith.constant 0 : index
      %c0_73 = arith.constant 0 : index
      %182 = vector.load %arg3[%c0_72, %c0_73] : memref<1x4xf32, #tpu.memory_space<vmem>>, vector<1x4xf32>
      tpu.vector_store %arg3[%c0_72, %c0_73], %181 {strides = array<i32>} : memref<1x4xf32, #tpu.memory_space<vmem>>, vector<1x4xf32>,
    } else {
    }
    return
  }
  func.func @transform_0(%arg0: i32) -> (i32, i32) {
    %c0_i32 = arith.constant 0 : i32
    %c0_i32_0 = arith.constant 0 : i32
    return %arg0, %c0_i32 : i32, i32
  }
  func.func @transform_1(%arg0: i32) -> (i32, i32) {
    %c0_i32 = arith.constant 0 : i32
    %c0_i32_0 = arith.constant 0 : i32
    %c0_i32_1 = arith.constant 0 : i32
    return %c0_i32, %c0_i32_0 : i32, i32
  }
  func.func @transform_2(%arg0: i32) -> (i32, i32) {
    %c0_i32 = arith.constant 0 : i32
    %c0_i32_0 = arith.constant 0 : i32
    %c0_i32_1 = arith.constant 0 : i32
    return %c0_i32, %c0_i32_0 : i32, i32
  }
}

</mosaic_0001>

<llo_original>
// kernel: tpu_custom_call.1
$region0: #{tpu_custom_call.1}
  #allocation0 [shape = 'u32[]', space=smem, size = 0x4, offset = 0x4, fixed_abs, tag = 'smem constant byte address 0x4 - core index']
  #allocation1 [shape = 'u32[144,128]{1,0:T(1,128)}', space=vmem, size = 0x12000, scoped, tag = 'internal scratch']
  #allocation2 [shape = 'f32[1,3]{1,0:T(1,128)}', space=vmem, size = 0x200, scoped, tag = 'scratch operand']
  #allocation3 [shape = 'f32[1,3]{1,0:T(1,128)}', space=vmem, size = 0x200, scoped, tag = 'scratch operand']
  #allocation4 [shape = 'f32[1,2]{1,0:T(1,128)}', space=vmem, size = 0x200, scoped, tag = 'scratch operand']
  #allocation5 [shape = 'f32[1,3]{1,0:T(1,128)}', space=vmem, size = 0x200, scoped, tag = 'scratch operand']
  #allocation6 [shape = 'f32[1,1]{1,0:T(1,128)}', space=vmem, size = 0x200, scoped, tag = 'scratch operand']
  %s0 = inlined_call_operand.vmem [shape: f32[512,16], index: 0, kind: input, shape index: {}]
  %s1 = inlined_call_operand.vmem [shape: f32[16,48], index: 1, kind: input, shape index: {}]
  %s2 = inlined_call_operand.hbm [shape: f32[1,4], index: 2, kind: output, shape index: {}]
  %s3 = sld [smem:[#allocation0]]
  $region49: #{tpu_custom_call.1} parent=0
    _
  %s5 = ssub.s32 1, %s3
  %s6 = scalar_select 0, %s5, %s3
  $region1: #{tpu_custom_call.1} parent=0
    #allocation7 [shape = 'u8[512]{0}', space=vmem, size = 0x400, scoped, tag = 'output window, operand 0, single buffered']
    #allocation8 [shape = 's32[2]{0}', space=sflag, size = 0x8, scoped, tag = 'scoped memory for tpu_custom_call.1']
    %7 = vsyncpa [#allocation8], 0
    loop: start=0, step=1, limit=6
    $region2: #{tpu_custom_call.1} parent=1 // loop_pre_header
      _
    $region3: #{tpu_custom_call.1} parent=1 // loop_header
      %s9 = sphi 0, %s13
      %p10 = scmp.ge.s32.totalorder %s9, 6
      %s19 = sphi 0, %s21
      %s22 = sphi 0, %s19
      %s23 = sphi 0, %s22
      %s39 = sphi 0, %s23
      %s43 = sphi 0, %s43
      %s45 = sphi 0, %s43
      %s46 = sphi 0, %s45
      %s60 = sphi 0, %s46
      %s64 = sphi 0, %s64
      %s66 = sphi 0, %s64
      %s67 = sphi 0, %s66
      %s81 = sphi 0, %s67
    $region4: #{tpu_custom_call.1} parent=1 // loop_header_branch
      %12 = sbr.rel (%p10) target = $region8
    $region5: #{tpu_custom_call.1} parent=1 // loop_body
      %s14 = ssub.s32 %s9, 1
      %s15 = ssub.s32 %s9, 2
      %s16 = sadd.s32 %s9, 1
      %s17 = ssub.s32 %s9, %s16
      %p18 = scmp.eq.s32.totalorder %s17, 0
      %s20 = sadd.s32 %s19, 1
      %s21 = scalar_select %p18, %s19, %s20
      %p24 = pneg %p18
      %p25 = scmp.eq.s32.totalorder %s9, 3
      %p26 = por %p24, %p25
      %p27 = scmp.ne.s32.totalorder %s19, %s22
      %p28 = scmp.eq.s32.totalorder %s9, 0
      %p29 = por %p27, %p28
      %p30 = scmp.ne.s32.totalorder %s19, %s22
      %p31 = scmp.eq.s32.totalorder %s14, 3
      %p32 = por %p30, %p31
      %p33 = scmp.ne.s32.totalorder %s22, %s23
      %p34 = scmp.eq.s32.totalorder %s14, 0
      %p35 = por %p33, %p34
      %p36 = scmp.ne.s32.totalorder %s22, %s23
      %p37 = scmp.eq.s32.totalorder %s15, 3
      %p38 = por %p36, %p37
      %p40 = scmp.ne.s32.totalorder %s23, %s39
      %p41 = scmp.eq.s32.totalorder %s15, 0
      %p42 = por %p40, %p41
      %s44 = sadd.s32 %s43, 1
      %p47 = scmp.eq.s32.totalorder %s9, 3
      %p48 = scmp.ne.s32.totalorder %s43, %s45
      %p49 = scmp.eq.s32.totalorder %s9, 0
      %p50 = por %p48, %p49
      %p51 = scmp.ne.s32.totalorder %s43, %s45
      %p52 = scmp.eq.s32.totalorder %s14, 3
      %p53 = por %p51, %p52
      %p54 = scmp.ne.s32.totalorder %s45, %s46
      %p55 = scmp.eq.s32.totalorder %s14, 0
      %p56 = por %p54, %p55
      %p57 = scmp.ne.s32.totalorder %s45, %s46
      %p58 = scmp.eq.s32.totalorder %s15, 3
      %p59 = por %p57, %p58
      %p61 = scmp.ne.s32.totalorder %s46, %s60
      %p62 = scmp.eq.s32.totalorder %s15, 0
      %p63 = por %p61, %p62
      %s65 = sadd.s32 %s64, 1
      %p68 = scmp.eq.s32.totalorder %s9, 3
      %p69 = scmp.ne.s32.totalorder %s64, %s66
      %p70 = scmp.eq.s32.totalorder %s9, 0
      %p71 = por %p69, %p70
      %p72 = scmp.ne.s32.totalorder %s64, %s66
      %p73 = scmp.eq.s32.totalorder %s14, 3
      %p74 = por %p72, %p73
      %p75 = scmp.ne.s32.totalorder %s66, %s67
      %p76 = scmp.eq.s32.totalorder %s14, 0
      %p77 = por %p75, %p76
      %p78 = scmp.ne.s32.totalorder %s66, %s67
      %p79 = scmp.eq.s32.totalorder %s15, 3
      %p80 = por %p78, %p79
      %p82 = scmp.ne.s32.totalorder %s67, %s81
      %p83 = scmp.eq.s32.totalorder %s15, 0
      %p84 = por %p82, %p83
      %p85 = scmp.le.s32.totalorder 1, %s9
      %p86 = scmp.lt.s32.totalorder %s9, 5
      %p87 = pnand %p85, %p86
      %p88 = pneg %p87
      // Predicated region
      $region9: #{tpu_custom_call.1} parent=5 // pred_check
        _
      $region10: #{tpu_custom_call.1} parent=5 // pred_check_branch
        %90 = sbr.rel (%p87) target = $region12
      $region11: #{tpu_custom_call.1} parent=5 // pred_region
        %s91 = ssub.s32 %s9, 1
        // Predicated region
        $region13: #{tpu_custom_call.1} parent=11 // pred_check
          %p92 = pneg %p56
        $region14: #{tpu_custom_call.1} parent=11 // pred_check_branch
          %94 = sbr.rel (%p92) target = $region16
        $region15: #{tpu_custom_call.1} parent=11 // pred_region
          _
        $region16: #{tpu_custom_call.1} parent=11 // pred_fallthru
          _
      $region12: #{tpu_custom_call.1} parent=5 // pred_fallthru
        _
      %p95 = scmp.lt.s32.totalorder %s9, 4
      // Predicated region
      $region17: #{tpu_custom_call.1} parent=5 // pred_check
        %p96 = pneg %p95
      $region18: #{tpu_custom_call.1} parent=5 // pred_check_branch
        %98 = sbr.rel (%p96) target = $region20
      $region19: #{tpu_custom_call.1} parent=5 // pred_region
        // Predicated region
        $region21: #{tpu_custom_call.1} parent=19 // pred_check
          %p99 = pneg %p29
        $region22: #{tpu_custom_call.1} parent=19 // pred_check_branch
          %101 = sbr.rel (%p99) target = $region24
        $region23: #{tpu_custom_call.1} parent=19 // pred_region
          %s102 = smul.u32 16, %s9
          %p103 = scmp.lt.s32.totalorder %s102, 63
          %s104 = scalar_select %p103, %s102, 63
          %s105 = smul.addr %s104, 8
          %s106 = scalar_lea.vmem %s0, %s105
          %s107 = smul.u32 16, %s9
        $region24: #{tpu_custom_call.1} parent=19 // pred_fallthru
          _
      $region20: #{tpu_custom_call.1} parent=5 // pred_fallthru
        _
      %p108 = scmp.le.s32.totalorder 1, %s9
      %p109 = scmp.lt.s32.totalorder %s9, 5
      %p110 = pnand %p108, %p109
      %p111 = pneg %p110
      // Predicated region
      $region25: #{tpu_custom_call.1} parent=5 // pred_check
        _
      $region26: #{tpu_custom_call.1} parent=5 // pred_check_branch
        %113 = sbr.rel (%p110) target = $region28
      $region27: #{tpu_custom_call.1} parent=5 // pred_region
        %s114 = ssub.s32 %s9, 1
        %s115 = smul.u32 16, %s14
        %p116 = scmp.lt.s32.totalorder %s115, 63
        %s117 = scalar_select %p116, %s115, 63
        %s118 = smul.addr %s117, 8
        %s119 = scalar_lea.vmem %s0, %s118
        %p120 = pneg %p35
        %p121 = pneg %p32
        %p122 = pneg %p56
        %p123 = pneg %p53
        %p124 = pneg %p77
        %p125 = pneg %p74
        %s126 = smul.u32 16, %s14
        %p127 = scmp.lt.s32.totalorder %s126, 63
        %s128 = scalar_select %p127, %s126, 63
        %s129 = smul.addr %s128, 8
        %s130 = scalar_lea.vmem %s0, %s129
        %s131 = smul.u32 16, %s14
        %p132 = scmp.eq.s32.totalorder %s14, 0
        // Predicated region
        $region29: #{tpu_custom_call.1} parent=27 // pred_check
          %p133 = pneg %p132
        $region30: #{tpu_custom_call.1} parent=27 // pred_check_branch
          %135 = sbr.rel (%p133) target = $region32
        $region31: #{tpu_custom_call.1} parent=27 // pred_region
          %vm136 = vcmask 16384
          %137 = vst.msk [vmem:[#allocation2] sm:$0x1] %vm136, 0.0
          %138 = vst.msk [vmem:[#allocation3] sm:$0x1] %vm136, 0.0
          %vm139 = vcmask 8192
          %140 = vst.msk [vmem:[#allocation4] sm:$0x1] %vm139, 0.0
          %141 = vst.msk [vmem:[#allocation5] sm:$0x1] %vm136, 0.0
          %vm142 = vcmask 0
          %143 = vst.msk [vmem:[#allocation6] sm:$0x1] %vm142, 0.0
        $region32: #{tpu_custom_call.1} parent=27 // pred_fallthru
          _
        %v144 = vld [vmem:[%s130] sm:$0xff]
        %v145 = vld [vmem:[%s130 + $0x8] sm:$0xff]
        %v146 = vld [vmem:[%s130 + $0x10] sm:$0xff]
        %v147 = vld [vmem:[%s130 + $0x18] sm:$0xff]
        %v148 = vld [vmem:[%s130 + $0x20] sm:$0xff]
        %v149 = vld [vmem:[%s130 + $0x28] sm:$0xff]
        %v150 = vld [vmem:[%s130 + $0x30] sm:$0xff]
        %v151 = vld [vmem:[%s130 + $0x38] sm:$0xff]
        %v152 = vld [vmem:[%s130 + $0x40] sm:$0xff]
        %v153 = vld [vmem:[%s130 + $0x48] sm:$0xff]
        %v154 = vld [vmem:[%s130 + $0x50] sm:$0xff]
        %v155 = vld [vmem:[%s130 + $0x58] sm:$0xff]
        %v156 = vld [vmem:[%s130 + $0x60] sm:$0xff]
        %v157 = vld [vmem:[%s130 + $0x68] sm:$0xff]
        %v158 = vld [vmem:[%s130 + $0x70] sm:$0xff]
        %v159 = vld [vmem:[%s130 + $0x78] sm:$0xff]
        %v160 = vsub.f32 %v144, 0.5
        %v161 = vsub.f32 %v145, 0.5
        %v162 = vsub.f32 %v146, 0.5
        %v163 = vsub.f32 %v147, 0.5
        %v164 = vsub.f32 %v148, 0.5
        %v165 = vsub.f32 %v149, 0.5
        %v166 = vsub.f32 %v150, 0.5
        %v167 = vsub.f32 %v151, 0.5
        %v168 = vsub.f32 %v152, 0.5
        %v169 = vsub.f32 %v153, 0.5
        %v170 = vsub.f32 %v154, 0.5
        %v171 = vsub.f32 %v155, 0.5
        %v172 = vsub.f32 %v156, 0.5
        %v173 = vsub.f32 %v157, 0.5
        %v174 = vsub.f32 %v158, 0.5
        %v175 = vsub.f32 %v159, 0.5
        %v176 = vmul.f32 %v160, 2.0
        %v177 = vmul.f32 %v161, 2.0
        %v178 = vmul.f32 %v162, 2.0
        %v179 = vmul.f32 %v163, 2.0
        %v180 = vmul.f32 %v164, 2.0
        %v181 = vmul.f32 %v165, 2.0
        %v182 = vmul.f32 %v166, 2.0
        %v183 = vmul.f32 %v167, 2.0
        %v184 = vmul.f32 %v168, 2.0
        %v185 = vmul.f32 %v169, 2.0
        %v186 = vmul.f32 %v170, 2.0
        %v187 = vmul.f32 %v171, 2.0
        %v188 = vmul.f32 %v172, 2.0
        %v189 = vmul.f32 %v173, 2.0
        %v190 = vmul.f32 %v174, 2.0
        %v191 = vmul.f32 %v175, 2.0
        %v192 = vadd.f32 %v176, 1.0
        %v193 = vadd.f32 %v177, 1.0
        %v194 = vadd.f32 %v178, 1.0
        %v195 = vadd.f32 %v179, 1.0
        %v196 = vadd.f32 %v180, 1.0
        %v197 = vadd.f32 %v181, 1.0
        %v198 = vadd.f32 %v182, 1.0
        %v199 = vadd.f32 %v183, 1.0
        %v200 = vadd.f32 %v184, 1.0
        %v201 = vadd.f32 %v185, 1.0
        %v202 = vadd.f32 %v186, 1.0
        %v203 = vadd.f32 %v187, 1.0
        %v204 = vadd.f32 %v188, 1.0
        %v205 = vadd.f32 %v189, 1.0
        %v206 = vadd.f32 %v190, 1.0
        %v207 = vadd.f32 %v191, 1.0
        %v208 = vmul.f32 %v192, 16.0
        %v209 = vmul.f32 %v193, 16.0
        %v210 = vmul.f32 %v194, 16.0
        %v211 = vmul.f32 %v195, 16.0
        %v212 = vmul.f32 %v196, 16.0
        %v213 = vmul.f32 %v197, 16.0
        %v214 = vmul.f32 %v198, 16.0
        %v215 = vmul.f32 %v199, 16.0
        %v216 = vmul.f32 %v200, 16.0
        %v217 = vmul.f32 %v201, 16.0
        %v218 = vmul.f32 %v202, 16.0
        %v219 = vmul.f32 %v203, 16.0
        %v220 = vmul.f32 %v204, 16.0
        %v221 = vmul.f32 %v205, 16.0
        %v222 = vmul.f32 %v206, 16.0
        %v223 = vmul.f32 %v207, 16.0
        %v224 = vsub.f32 %v208, 1.0
        %v225 = vsub.f32 %v209, 1.0
        %v226 = vsub.f32 %v210, 1.0
        %v227 = vsub.f32 %v211, 1.0
        %v228 = vsub.f32 %v212, 1.0
        %v229 = vsub.f32 %v213, 1.0
        %v230 = vsub.f32 %v214, 1.0
        %v231 = vsub.f32 %v215, 1.0
        %v232 = vsub.f32 %v216, 1.0
        %v233 = vsub.f32 %v217, 1.0
        %v234 = vsub.f32 %v218, 1.0
        %v235 = vsub.f32 %v219, 1.0
        %v236 = vsub.f32 %v220, 1.0
        %v237 = vsub.f32 %v221, 1.0
        %v238 = vsub.f32 %v222, 1.0
        %v239 = vsub.f32 %v223, 1.0
        %v240 = vmul.f32 %v224, 0.5
        %v241 = vmul.f32 %v225, 0.5
        %v242 = vmul.f32 %v226, 0.5
        %v243 = vmul.f32 %v227, 0.5
        %v244 = vmul.f32 %v228, 0.5
        %v245 = vmul.f32 %v229, 0.5
        %v246 = vmul.f32 %v230, 0.5
        %v247 = vmul.f32 %v231, 0.5
        %v248 = vmul.f32 %v232, 0.5
        %v249 = vmul.f32 %v233, 0.5
        %v250 = vmul.f32 %v234, 0.5
        %v251 = vmul.f32 %v235, 0.5
        %v252 = vmul.f32 %v236, 0.5
        %v253 = vmul.f32 %v237, 0.5
        %v254 = vmul.f32 %v238, 0.5
        %v255 = vmul.f32 %v239, 0.5
        %v256 = vfloor.f32 %v240
        %v257 = vfloor.f32 %v241
        %v258 = vfloor.f32 %v242
        %v259 = vfloor.f32 %v243
        %v260 = vfloor.f32 %v244
        %v261 = vfloor.f32 %v245
        %v262 = vfloor.f32 %v246
        %v263 = vfloor.f32 %v247
        %v264 = vfloor.f32 %v248
        %v265 = vfloor.f32 %v249
        %v266 = vfloor.f32 %v250
        %v267 = vfloor.f32 %v251
        %v268 = vfloor.f32 %v252
        %v269 = vfloor.f32 %v253
        %v270 = vfloor.f32 %v254
        %v271 = vfloor.f32 %v255
        %v272 = vsub.f32 %v240, %v256
        %v273 = vsub.f32 %v241, %v257
        %v274 = vsub.f32 %v242, %v258
        %v275 = vsub.f32 %v243, %v259
        %v276 = vsub.f32 %v244, %v260
        %v277 = vsub.f32 %v245, %v261
        %v278 = vsub.f32 %v246, %v262
        %v279 = vsub.f32 %v247, %v263
        %v280 = vsub.f32 %v248, %v264
        %v281 = vsub.f32 %v249, %v265
        %v282 = vsub.f32 %v250, %v266
        %v283 = vsub.f32 %v251, %v267
        %v284 = vsub.f32 %v252, %v268
        %v285 = vsub.f32 %v253, %v269
        %v286 = vsub.f32 %v254, %v270
        %v287 = vsub.f32 %v255, %v271
        %v288 = vcvt.f32.s32.to.zero.pseudo %v256
        %v289 = vcvt.f32.s32.to.zero.pseudo %v257
        %v290 = vcvt.f32.s32.to.zero.pseudo %v258
        %v291 = vcvt.f32.s32.to.zero.pseudo %v259
        %v292 = vcvt.f32.s32.to.zero.pseudo %v260
        %v293 = vcvt.f32.s32.to.zero.pseudo %v261
        %v294 = vcvt.f32.s32.to.zero.pseudo %v262
        %v295 = vcvt.f32.s32.to.zero.pseudo %v263
        %v296 = vcvt.f32.s32.to.zero.pseudo %v264
        %v297 = vcvt.f32.s32.to.zero.pseudo %v265
        %v298 = vcvt.f32.s32.to.zero.pseudo %v266
        %v299 = vcvt.f32.s32.to.zero.pseudo %v267
        %v300 = vcvt.f32.s32.to.zero.pseudo %v268
        %v301 = vcvt.f32.s32.to.zero.pseudo %v269
        %v302 = vcvt.f32.s32.to.zero.pseudo %v270
        %v303 = vcvt.f32.s32.to.zero.pseudo %v271
        %v304 = vlaneseq
        %v305 = vand.u32 %v304, 127
        %306 = vset.pattern.permute.xlu0 1
        %307 = vperm.xlu0 %306, %v288
        %v308 = vpop.permute.xlu0 %307
        %309 = vset.pattern.permute.xlu0 1
        %310 = vperm.xlu0 %309, %v289
        %v311 = vpop.permute.xlu0 %310
        %312 = vset.pattern.permute.xlu0 1
        %313 = vperm.xlu0 %312, %v290
        %v314 = vpop.permute.xlu0 %313
        %315 = vset.pattern.permute.xlu0 1
        %316 = vperm.xlu0 %315, %v291
        %v317 = vpop.permute.xlu0 %316
        %318 = vset.pattern.permute.xlu0 1
        %319 = vperm.xlu0 %318, %v292
        %v320 = vpop.permute.xlu0 %319
        %321 = vset.pattern.permute.xlu0 1
        %322 = vperm.xlu0 %321, %v293
        %v323 = vpop.permute.xlu0 %322
        %324 = vset.pattern.permute.xlu0 1
        %325 = vperm.xlu0 %324, %v294
        %v326 = vpop.permute.xlu0 %325
        %327 = vset.pattern.permute.xlu0 1
        %328 = vperm.xlu0 %327, %v295
        %v329 = vpop.permute.xlu0 %328
        %330 = vset.pattern.permute.xlu0 1
        %331 = vperm.xlu0 %330, %v296
        %v332 = vpop.permute.xlu0 %331
        %333 = vset.pattern.permute.xlu0 1
        %334 = vperm.xlu0 %333, %v297
        %v335 = vpop.permute.xlu0 %334
        %336 = vset.pattern.permute.xlu0 1
        %337 = vperm.xlu0 %336, %v298
        %v338 = vpop.permute.xlu0 %337
        %339 = vset.pattern.permute.xlu0 1
        %340 = vperm.xlu0 %339, %v299
        %v341 = vpop.permute.xlu0 %340
        %342 = vset.pattern.permute.xlu0 1
        %343 = vperm.xlu0 %342, %v300
        %v344 = vpop.permute.xlu0 %343
        %345 = vset.pattern.permute.xlu0 1
        %346 = vperm.xlu0 %345, %v301
        %v347 = vpop.permute.xlu0 %346
        %348 = vset.pattern.permute.xlu0 1
        %349 = vperm.xlu0 %348, %v302
        %v350 = vpop.permute.xlu0 %349
        %351 = vset.pattern.permute.xlu0 1
        %352 = vperm.xlu0 %351, %v303
        %v353 = vpop.permute.xlu0 %352
        %vm354 = vcmp.eq.s32.totalorder %v305, %v308
        %vm355 = vcmp.eq.s32.totalorder %v305, %v311
        %vm356 = vcmp.eq.s32.totalorder %v305, %v314
        %vm357 = vcmp.eq.s32.totalorder %v305, %v317
        %vm358 = vcmp.eq.s32.totalorder %v305, %v320
        %vm359 = vcmp.eq.s32.totalorder %v305, %v323
        %vm360 = vcmp.eq.s32.totalorder %v305, %v326
        %vm361 = vcmp.eq.s32.totalorder %v305, %v329
        %vm362 = vcmp.eq.s32.totalorder %v305, %v332
        %vm363 = vcmp.eq.s32.totalorder %v305, %v335
        %vm364 = vcmp.eq.s32.totalorder %v305, %v338
        %vm365 = vcmp.eq.s32.totalorder %v305, %v341
        %vm366 = vcmp.eq.s32.totalorder %v305, %v344
        %vm367 = vcmp.eq.s32.totalorder %v305, %v347
        %vm368 = vcmp.eq.s32.totalorder %v305, %v350
        %vm369 = vcmp.eq.s32.totalorder %v305, %v353
        %v370 = vsub.f32 1.0, %v272
        %v371 = vsub.f32 1.0, %v273
        %v372 = vsub.f32 1.0, %v274
        %v373 = vsub.f32 1.0, %v275
        %v374 = vsub.f32 1.0, %v276
        %v375 = vsub.f32 1.0, %v277
        %v376 = vsub.f32 1.0, %v278
        %v377 = vsub.f32 1.0, %v279
        %v378 = vsub.f32 1.0, %v280
        %v379 = vsub.f32 1.0, %v281
        %v380 = vsub.f32 1.0, %v282
        %v381 = vsub.f32 1.0, %v283
        %v382 = vsub.f32 1.0, %v284
        %v383 = vsub.f32 1.0, %v285
        %v384 = vsub.f32 1.0, %v286
        %v385 = vsub.f32 1.0, %v287
        %387 = vset.pattern.permute.xlu0 1
        %388 = vperm.xlu0 %387, %v370
        %v389 = vpop.permute.xlu0 %388
        %392 = vset.pattern.permute.xlu0 1
        %393 = vperm.xlu0 %392, %v371
        %v394 = vpop.permute.xlu0 %393
        %397 = vset.pattern.permute.xlu0 1
        %398 = vperm.xlu0 %397, %v372
        %v399 = vpop.permute.xlu0 %398
        %402 = vset.pattern.permute.xlu0 1
        %403 = vperm.xlu0 %402, %v373
        %v404 = vpop.permute.xlu0 %403
        %407 = vset.pattern.permute.xlu0 1
        %408 = vperm.xlu0 %407, %v374
        %v409 = vpop.permute.xlu0 %408
        %412 = vset.pattern.permute.xlu0 1
        %413 = vperm.xlu0 %412, %v375
        %v414 = vpop.permute.xlu0 %413
        %417 = vset.pattern.permute.xlu0 1
        %418 = vperm.xlu0 %417, %v376
        %v419 = vpop.permute.xlu0 %418
        %422 = vset.pattern.permute.xlu0 1
        %423 = vperm.xlu0 %422, %v377
        %v424 = vpop.permute.xlu0 %423
        %427 = vset.pattern.permute.xlu0 1
        %428 = vperm.xlu0 %427, %v378
        %v429 = vpop.permute.xlu0 %428
        %432 = vset.pattern.permute.xlu0 1
        %433 = vperm.xlu0 %432, %v379
        %v434 = vpop.permute.xlu0 %433
        %437 = vset.pattern.permute.xlu0 1
        %438 = vperm.xlu0 %437, %v380
        %v439 = vpop.permute.xlu0 %438
        %442 = vset.pattern.permute.xlu0 1
        %443 = vperm.xlu0 %442, %v381
        %v444 = vpop.permute.xlu0 %443
        %447 = vset.pattern.permute.xlu0 1
        %448 = vperm.xlu0 %447, %v382
        %v449 = vpop.permute.xlu0 %448
        %452 = vset.pattern.permute.xlu0 1
        %453 = vperm.xlu0 %452, %v383
        %v454 = vpop.permute.xlu0 %453
        %457 = vset.pattern.permute.xlu0 1
        %458 = vperm.xlu0 %457, %v384
        %v459 = vpop.permute.xlu0 %458
        %462 = vset.pattern.permute.xlu0 1
        %463 = vperm.xlu0 %462, %v385
        %v464 = vpop.permute.xlu0 %463
        %v466 = vsel %vm354, %v389, 0.0
        %v467 = vsel %vm355, %v394, 0.0
        %v468 = vsel %vm356, %v399, 0.0
        %v469 = vsel %vm357, %v404, 0.0
        %v470 = vsel %vm358, %v409, 0.0
        %v471 = vsel %vm359, %v414, 0.0
        %v472 = vsel %vm360, %v419, 0.0
        %v473 = vsel %vm361, %v424, 0.0
        %v474 = vsel %vm362, %v429, 0.0
        %v475 = vsel %vm363, %v434, 0.0
        %v476 = vsel %vm364, %v439, 0.0
        %v477 = vsel %vm365, %v444, 0.0
        %v478 = vsel %vm366, %v449, 0.0
        %v479 = vsel %vm367, %v454, 0.0
        %v480 = vsel %vm368, %v459, 0.0
        %v481 = vsel %vm369, %v464, 0.0
        %v482 = vadd.s32 %v288, 1
        %v483 = vadd.s32 %v289, 1
        %v484 = vadd.s32 %v290, 1
        %v485 = vadd.s32 %v291, 1
        %v486 = vadd.s32 %v292, 1
        %v487 = vadd.s32 %v293, 1
        %v488 = vadd.s32 %v294, 1
        %v489 = vadd.s32 %v295, 1
        %v490 = vadd.s32 %v296, 1
        %v491 = vadd.s32 %v297, 1
        %v492 = vadd.s32 %v298, 1
        %v493 = vadd.s32 %v299, 1
        %v494 = vadd.s32 %v300, 1
        %v495 = vadd.s32 %v301, 1
        %v496 = vadd.s32 %v302, 1
        %v497 = vadd.s32 %v303, 1
        %498 = vset.pattern.permute.xlu0 1
        %499 = vperm.xlu0 %498, %v482
        %v500 = vpop.permute.xlu0 %499
        %501 = vset.pattern.permute.xlu0 1
        %502 = vperm.xlu0 %501, %v483
        %v503 = vpop.permute.xlu0 %502
        %504 = vset.pattern.permute.xlu0 1
        %505 = vperm.xlu0 %504, %v484
        %v506 = vpop.permute.xlu0 %505
        %507 = vset.pattern.permute.xlu0 1
        %508 = vperm.xlu0 %507, %v485
        %v509 = vpop.permute.xlu0 %508
        %510 = vset.pattern.permute.xlu0 1
        %511 = vperm.xlu0 %510, %v486
        %v512 = vpop.permute.xlu0 %511
        %513 = vset.pattern.permute.xlu0 1
        %514 = vperm.xlu0 %513, %v487
        %v515 = vpop.permute.xlu0 %514
        %516 = vset.pattern.permute.xlu0 1
        %517 = vperm.xlu0 %516, %v488
        %v518 = vpop.permute.xlu0 %517
        %519 = vset.pattern.permute.xlu0 1
        %520 = vperm.xlu0 %519, %v489
        %v521 = vpop.permute.xlu0 %520
        %522 = vset.pattern.permute.xlu0 1
        %523 = vperm.xlu0 %522, %v490
        %v524 = vpop.permute.xlu0 %523
        %525 = vset.pattern.permute.xlu0 1
        %526 = vperm.xlu0 %525, %v491
        %v527 = vpop.permute.xlu0 %526
        %528 = vset.pattern.permute.xlu0 1
        %529 = vperm.xlu0 %528, %v492
        %v530 = vpop.permute.xlu0 %529
        %531 = vset.pattern.permute.xlu0 1
        %532 = vperm.xlu0 %531, %v493
        %v533 = vpop.permute.xlu0 %532
        %534 = vset.pattern.permute.xlu0 1
        %535 = vperm.xlu0 %534, %v494
        %v536 = vpop.permute.xlu0 %535
        %537 = vset.pattern.permute.xlu0 1
        %538 = vperm.xlu0 %537, %v495
        %v539 = vpop.permute.xlu0 %538
        %540 = vset.pattern.permute.xlu0 1
        %541 = vperm.xlu0 %540, %v496
        %v542 = vpop.permute.xlu0 %541
        %543 = vset.pattern.permute.xlu0 1
        %544 = vperm.xlu0 %543, %v497
        %v545 = vpop.permute.xlu0 %544
        %vm546 = vcmp.eq.s32.totalorder %v305, %v500
        %vm547 = vcmp.eq.s32.totalorder %v305, %v503
        %vm548 = vcmp.eq.s32.totalorder %v305, %v506
        %vm549 = vcmp.eq.s32.totalorder %v305, %v509
        %vm550 = vcmp.eq.s32.totalorder %v305, %v512
        %vm551 = vcmp.eq.s32.totalorder %v305, %v515
        %vm552 = vcmp.eq.s32.totalorder %v305, %v518
        %vm553 = vcmp.eq.s32.totalorder %v305, %v521
        %vm554 = vcmp.eq.s32.totalorder %v305, %v524
        %vm555 = vcmp.eq.s32.totalorder %v305, %v527
        %vm556 = vcmp.eq.s32.totalorder %v305, %v530
        %vm557 = vcmp.eq.s32.totalorder %v305, %v533
        %vm558 = vcmp.eq.s32.totalorder %v305, %v536
        %vm559 = vcmp.eq.s32.totalorder %v305, %v539
        %vm560 = vcmp.eq.s32.totalorder %v305, %v542
        %vm561 = vcmp.eq.s32.totalorder %v305, %v545
        %563 = vset.pattern.permute.xlu0 1
        %564 = vperm.xlu0 %563, %v272
        %v565 = vpop.permute.xlu0 %564
        %568 = vset.pattern.permute.xlu0 1
        %569 = vperm.xlu0 %568, %v273
        %v570 = vpop.permute.xlu0 %569
        %573 = vset.pattern.permute.xlu0 1
        %574 = vperm.xlu0 %573, %v274
        %v575 = vpop.permute.xlu0 %574
        %578 = vset.pattern.permute.xlu0 1
        %579 = vperm.xlu0 %578, %v275
        %v580 = vpop.permute.xlu0 %579
        %583 = vset.pattern.permute.xlu0 1
        %584 = vperm.xlu0 %583, %v276
        %v585 = vpop.permute.xlu0 %584
        %588 = vset.pattern.permute.xlu0 1
        %589 = vperm.xlu0 %588, %v277
        %v590 = vpop.permute.xlu0 %589
        %593 = vset.pattern.permute.xlu0 1
        %594 = vperm.xlu0 %593, %v278
        %v595 = vpop.permute.xlu0 %594
        %598 = vset.pattern.permute.xlu0 1
        %599 = vperm.xlu0 %598, %v279
        %v600 = vpop.permute.xlu0 %599
        %603 = vset.pattern.permute.xlu0 1
        %604 = vperm.xlu0 %603, %v280
        %v605 = vpop.permute.xlu0 %604
        %608 = vset.pattern.permute.xlu0 1
        %609 = vperm.xlu0 %608, %v281
        %v610 = vpop.permute.xlu0 %609
        %613 = vset.pattern.permute.xlu0 1
        %614 = vperm.xlu0 %613, %v282
        %v615 = vpop.permute.xlu0 %614
        %618 = vset.pattern.permute.xlu0 1
        %619 = vperm.xlu0 %618, %v283
        %v620 = vpop.permute.xlu0 %619
        %623 = vset.pattern.permute.xlu0 1
        %624 = vperm.xlu0 %623, %v284
        %v625 = vpop.permute.xlu0 %624
        %628 = vset.pattern.permute.xlu0 1
        %629 = vperm.xlu0 %628, %v285
        %v630 = vpop.permute.xlu0 %629
        %633 = vset.pattern.permute.xlu0 1
        %634 = vperm.xlu0 %633, %v286
        %v635 = vpop.permute.xlu0 %634
        %638 = vset.pattern.permute.xlu0 1
        %639 = vperm.xlu0 %638, %v287
        %v640 = vpop.permute.xlu0 %639
        %v642 = vsel %vm546, %v565, 0.0
        %v643 = vsel %vm547, %v570, 0.0
        %v644 = vsel %vm548, %v575, 0.0
        %v645 = vsel %vm549, %v580, 0.0
        %v646 = vsel %vm550, %v585, 0.0
        %v647 = vsel %vm551, %v590, 0.0
        %v648 = vsel %vm552, %v595, 0.0
        %v649 = vsel %vm553, %v600, 0.0
        %v650 = vsel %vm554, %v605, 0.0
        %v651 = vsel %vm555, %v610, 0.0
        %v652 = vsel %vm556, %v615, 0.0
        %v653 = vsel %vm557, %v620, 0.0
        %v654 = vsel %vm558, %v625, 0.0
        %v655 = vsel %vm559, %v630, 0.0
        %v656 = vsel %vm560, %v635, 0.0
        %v657 = vsel %vm561, %v640, 0.0
        %v658 = vadd.f32 %v466, %v642
        %v659 = vadd.f32 %v467, %v643
        %v660 = vadd.f32 %v468, %v644
        %v661 = vadd.f32 %v469, %v645
        %v662 = vadd.f32 %v470, %v646
        %v663 = vadd.f32 %v471, %v647
        %v664 = vadd.f32 %v472, %v648
        %v665 = vadd.f32 %v473, %v649
        %v666 = vadd.f32 %v474, %v650
        %v667 = vadd.f32 %v475, %v651
        %v668 = vadd.f32 %v476, %v652
        %v669 = vadd.f32 %v477, %v653
        %v670 = vadd.f32 %v478, %v654
        %v671 = vadd.f32 %v479, %v655
        %v672 = vadd.f32 %v480, %v656
        %v673 = vadd.f32 %v481, %v657
        %674 = vset.pattern.permute.xlu0 0
        %675 = vperm.xlu0 %674, %v288
        %v676 = vpop.permute.xlu0 %675
        %677 = vset.pattern.permute.xlu0 0
        %678 = vperm.xlu0 %677, %v289
        %v679 = vpop.permute.xlu0 %678
        %680 = vset.pattern.permute.xlu0 0
        %681 = vperm.xlu0 %680, %v290
        %v682 = vpop.permute.xlu0 %681
        %683 = vset.pattern.permute.xlu0 0
        %684 = vperm.xlu0 %683, %v291
        %v685 = vpop.permute.xlu0 %684
        %686 = vset.pattern.permute.xlu0 0
        %687 = vperm.xlu0 %686, %v292
        %v688 = vpop.permute.xlu0 %687
        %689 = vset.pattern.permute.xlu0 0
        %690 = vperm.xlu0 %689, %v293
        %v691 = vpop.permute.xlu0 %690
        %692 = vset.pattern.permute.xlu0 0
        %693 = vperm.xlu0 %692, %v294
        %v694 = vpop.permute.xlu0 %693
        %695 = vset.pattern.permute.xlu0 0
        %696 = vperm.xlu0 %695, %v295
        %v697 = vpop.permute.xlu0 %696
        %698 = vset.pattern.permute.xlu0 0
        %699 = vperm.xlu0 %698, %v296
        %v700 = vpop.permute.xlu0 %699
        %701 = vset.pattern.permute.xlu0 0
        %702 = vperm.xlu0 %701, %v297
        %v703 = vpop.permute.xlu0 %702
        %704 = vset.pattern.permute.xlu0 0
        %705 = vperm.xlu0 %704, %v298
        %v706 = vpop.permute.xlu0 %705
        %707 = vset.pattern.permute.xlu0 0
        %708 = vperm.xlu0 %707, %v299
        %v709 = vpop.permute.xlu0 %708
        %710 = vset.pattern.permute.xlu0 0
        %711 = vperm.xlu0 %710, %v300
        %v712 = vpop.permute.xlu0 %711
        %713 = vset.pattern.permute.xlu0 0
        %714 = vperm.xlu0 %713, %v301
        %v715 = vpop.permute.xlu0 %714
        %716 = vset.pattern.permute.xlu0 0
        %717 = vperm.xlu0 %716, %v302
        %v718 = vpop.permute.xlu0 %717
        %719 = vset.pattern.permute.xlu0 0
        %720 = vperm.xlu0 %719, %v303
        %v721 = vpop.permute.xlu0 %720
        %vm722 = vcmp.eq.s32.totalorder %v305, %v676
        %vm723 = vcmp.eq.s32.totalorder %v305, %v679
        %vm724 = vcmp.eq.s32.totalorder %v305, %v682
        %vm725 = vcmp.eq.s32.totalorder %v305, %v685
        %vm726 = vcmp.eq.s32.totalorder %v305, %v688
        %vm727 = vcmp.eq.s32.totalorder %v305, %v691
        %vm728 = vcmp.eq.s32.totalorder %v305, %v694
        %vm729 = vcmp.eq.s32.totalorder %v305, %v697
        %vm730 = vcmp.eq.s32.totalorder %v305, %v700
        %vm731 = vcmp.eq.s32.totalorder %v305, %v703
        %vm732 = vcmp.eq.s32.totalorder %v305, %v706
        %vm733 = vcmp.eq.s32.totalorder %v305, %v709
        %vm734 = vcmp.eq.s32.totalorder %v305, %v712
        %vm735 = vcmp.eq.s32.totalorder %v305, %v715
        %vm736 = vcmp.eq.s32.totalorder %v305, %v718
        %vm737 = vcmp.eq.s32.totalorder %v305, %v721
        %738 = vset.pattern.permute.xlu0 0
        %739 = vperm.xlu0 %738, %v370
        %v740 = vpop.permute.xlu0 %739
        %742 = vset.pattern.permute.xlu0 0
        %743 = vperm.xlu0 %742, %v371
        %v744 = vpop.permute.xlu0 %743
        %746 = vset.pattern.permute.xlu0 0
        %747 = vperm.xlu0 %746, %v372
        %v748 = vpop.permute.xlu0 %747
        %750 = vset.pattern.permute.xlu0 0
        %751 = vperm.xlu0 %750, %v373
        %v752 = vpop.permute.xlu0 %751
        %754 = vset.pattern.permute.xlu0 0
        %755 = vperm.xlu0 %754, %v374
        %v756 = vpop.permute.xlu0 %755
        %758 = vset.pattern.permute.xlu0 0
        %759 = vperm.xlu0 %758, %v375
        %v760 = vpop.permute.xlu0 %759
        %762 = vset.pattern.permute.xlu0 0
        %763 = vperm.xlu0 %762, %v376
        %v764 = vpop.permute.xlu0 %763
        %766 = vset.pattern.permute.xlu0 0
        %767 = vperm.xlu0 %766, %v377
        %v768 = vpop.permute.xlu0 %767
        %770 = vset.pattern.permute.xlu0 0
        %771 = vperm.xlu0 %770, %v378
        %v772 = vpop.permute.xlu0 %771
        %774 = vset.pattern.permute.xlu0 0
        %775 = vperm.xlu0 %774, %v379
        %v776 = vpop.permute.xlu0 %775
        %778 = vset.pattern.permute.xlu0 0
        %779 = vperm.xlu0 %778, %v380
        %v780 = vpop.permute.xlu0 %779
        %782 = vset.pattern.permute.xlu0 0
        %783 = vperm.xlu0 %782, %v381
        %v784 = vpop.permute.xlu0 %783
        %786 = vset.pattern.permute.xlu0 0
        %787 = vperm.xlu0 %786, %v382
        %v788 = vpop.permute.xlu0 %787
        %790 = vset.pattern.permute.xlu0 0
        %791 = vperm.xlu0 %790, %v383
        %v792 = vpop.permute.xlu0 %791
        %794 = vset.pattern.permute.xlu0 0
        %795 = vperm.xlu0 %794, %v384
        %v796 = vpop.permute.xlu0 %795
        %798 = vset.pattern.permute.xlu0 0
        %799 = vperm.xlu0 %798, %v385
        %v800 = vpop.permute.xlu0 %799
        %v802 = vsel %vm722, %v740, 0.0
        %v803 = vsel %vm723, %v744, 0.0
        %v804 = vsel %vm724, %v748, 0.0
        %v805 = vsel %vm725, %v752, 0.0
        %v806 = vsel %vm726, %v756, 0.0
        %v807 = vsel %vm727, %v760, 0.0
        %v808 = vsel %vm728, %v764, 0.0
        %v809 = vsel %vm729, %v768, 0.0
        %v810 = vsel %vm730, %v772, 0.0
        %v811 = vsel %vm731, %v776, 0.0
        %v812 = vsel %vm732, %v780, 0.0
        %v813 = vsel %vm733, %v784, 0.0
        %v814 = vsel %vm734, %v788, 0.0
        %v815 = vsel %vm735, %v792, 0.0
        %v816 = vsel %vm736, %v796, 0.0
        %v817 = vsel %vm737, %v800, 0.0
        %818 = vset.pattern.permute.xlu0 0
        %819 = vperm.xlu0 %818, %v482
        %v820 = vpop.permute.xlu0 %819
        %821 = vset.pattern.permute.xlu0 0
        %822 = vperm.xlu0 %821, %v483
        %v823 = vpop.permute.xlu0 %822
        %824 = vset.pattern.permute.xlu0 0
        %825 = vperm.xlu0 %824, %v484
        %v826 = vpop.permute.xlu0 %825
        %827 = vset.pattern.permute.xlu0 0
        %828 = vperm.xlu0 %827, %v485
        %v829 = vpop.permute.xlu0 %828
        %830 = vset.pattern.permute.xlu0 0
        %831 = vperm.xlu0 %830, %v486
        %v832 = vpop.permute.xlu0 %831
        %833 = vset.pattern.permute.xlu0 0
        %834 = vperm.xlu0 %833, %v487
        %v835 = vpop.permute.xlu0 %834
        %836 = vset.pattern.permute.xlu0 0
        %837 = vperm.xlu0 %836, %v488
        %v838 = vpop.permute.xlu0 %837
        %839 = vset.pattern.permute.xlu0 0
        %840 = vperm.xlu0 %839, %v489
        %v841 = vpop.permute.xlu0 %840
        %842 = vset.pattern.permute.xlu0 0
        %843 = vperm.xlu0 %842, %v490
        %v844 = vpop.permute.xlu0 %843
        %845 = vset.pattern.permute.xlu0 0
        %846 = vperm.xlu0 %845, %v491
        %v847 = vpop.permute.xlu0 %846
        %848 = vset.pattern.permute.xlu0 0
        %849 = vperm.xlu0 %848, %v492
        %v850 = vpop.permute.xlu0 %849
        %851 = vset.pattern.permute.xlu0 0
        %852 = vperm.xlu0 %851, %v493
        %v853 = vpop.permute.xlu0 %852
        %854 = vset.pattern.permute.xlu0 0
        %855 = vperm.xlu0 %854, %v494
        %v856 = vpop.permute.xlu0 %855
        %857 = vset.pattern.permute.xlu0 0
        %858 = vperm.xlu0 %857, %v495
        %v859 = vpop.permute.xlu0 %858
        %860 = vset.pattern.permute.xlu0 0
        %861 = vperm.xlu0 %860, %v496
        %v862 = vpop.permute.xlu0 %861
        %863 = vset.pattern.permute.xlu0 0
        %864 = vperm.xlu0 %863, %v497
        %v865 = vpop.permute.xlu0 %864
        %vm866 = vcmp.eq.s32.totalorder %v305, %v820
        %vm867 = vcmp.eq.s32.totalorder %v305, %v823
        %vm868 = vcmp.eq.s32.totalorder %v305, %v826
        %vm869 = vcmp.eq.s32.totalorder %v305, %v829
        %vm870 = vcmp.eq.s32.totalorder %v305, %v832
        %vm871 = vcmp.eq.s32.totalorder %v305, %v835
        %vm872 = vcmp.eq.s32.totalorder %v305, %v838
        %vm873 = vcmp.eq.s32.totalorder %v305, %v841
        %vm874 = vcmp.eq.s32.totalorder %v305, %v844
        %vm875 = vcmp.eq.s32.totalorder %v305, %v847
        %vm876 = vcmp.eq.s32.totalorder %v305, %v850
        %vm877 = vcmp.eq.s32.totalorder %v305, %v853
        %vm878 = vcmp.eq.s32.totalorder %v305, %v856
        %vm879 = vcmp.eq.s32.totalorder %v305, %v859
        %vm880 = vcmp.eq.s32.totalorder %v305, %v862
        %vm881 = vcmp.eq.s32.totalorder %v305, %v865
        %882 = vset.pattern.permute.xlu0 0
        %883 = vperm.xlu0 %882, %v272
        %v884 = vpop.permute.xlu0 %883
        %886 = vset.pattern.permute.xlu0 0
        %887 = vperm.xlu0 %886, %v273
        %v888 = vpop.permute.xlu0 %887
        %890 = vset.pattern.permute.xlu0 0
        %891 = vperm.xlu0 %890, %v274
        %v892 = vpop.permute.xlu0 %891
        %894 = vset.pattern.permute.xlu0 0
        %895 = vperm.xlu0 %894, %v275
        %v896 = vpop.permute.xlu0 %895
        %898 = vset.pattern.permute.xlu0 0
        %899 = vperm.xlu0 %898, %v276
        %v900 = vpop.permute.xlu0 %899
        %902 = vset.pattern.permute.xlu0 0
        %903 = vperm.xlu0 %902, %v277
        %v904 = vpop.permute.xlu0 %903
        %906 = vset.pattern.permute.xlu0 0
        %907 = vperm.xlu0 %906, %v278
        %v908 = vpop.permute.xlu0 %907
        %910 = vset.pattern.permute.xlu0 0
        %911 = vperm.xlu0 %910, %v279
        %v912 = vpop.permute.xlu0 %911
        %914 = vset.pattern.permute.xlu0 0
        %915 = vperm.xlu0 %914, %v280
        %v916 = vpop.permute.xlu0 %915
        %918 = vset.pattern.permute.xlu0 0
        %919 = vperm.xlu0 %918, %v281
        %v920 = vpop.permute.xlu0 %919
        %922 = vset.pattern.permute.xlu0 0
        %923 = vperm.xlu0 %922, %v282
        %v924 = vpop.permute.xlu0 %923
        %926 = vset.pattern.permute.xlu0 0
        %927 = vperm.xlu0 %926, %v283
        %v928 = vpop.permute.xlu0 %927
        %930 = vset.pattern.permute.xlu0 0
        %931 = vperm.xlu0 %930, %v284
        %v932 = vpop.permute.xlu0 %931
        %934 = vset.pattern.permute.xlu0 0
        %935 = vperm.xlu0 %934, %v285
        %v936 = vpop.permute.xlu0 %935
        %938 = vset.pattern.permute.xlu0 0
        %939 = vperm.xlu0 %938, %v286
        %v940 = vpop.permute.xlu0 %939
        %942 = vset.pattern.permute.xlu0 0
        %943 = vperm.xlu0 %942, %v287
        %v944 = vpop.permute.xlu0 %943
        %v946 = vsel %vm866, %v884, 0.0
        %v947 = vsel %vm867, %v888, 0.0
        %v948 = vsel %vm868, %v892, 0.0
        %v949 = vsel %vm869, %v896, 0.0
        %v950 = vsel %vm870, %v900, 0.0
        %v951 = vsel %vm871, %v904, 0.0
        %v952 = vsel %vm872, %v908, 0.0
        %v953 = vsel %vm873, %v912, 0.0
        %v954 = vsel %vm874, %v916, 0.0
        %v955 = vsel %vm875, %v920, 0.0
        %v956 = vsel %vm876, %v924, 0.0
        %v957 = vsel %vm877, %v928, 0.0
        %v958 = vsel %vm878, %v932, 0.0
        %v959 = vsel %vm879, %v936, 0.0
        %v960 = vsel %vm880, %v940, 0.0
        %v961 = vsel %vm881, %v944, 0.0
        %v962 = vadd.f32 %v802, %v946
        %v963 = vadd.f32 %v803, %v947
        %v964 = vadd.f32 %v804, %v948
        %v965 = vadd.f32 %v805, %v949
        %v966 = vadd.f32 %v806, %v950
        %v967 = vadd.f32 %v807, %v951
        %v968 = vadd.f32 %v808, %v952
        %v969 = vadd.f32 %v809, %v953
        %v970 = vadd.f32 %v810, %v954
        %v971 = vadd.f32 %v811, %v955
        %v972 = vadd.f32 %v812, %v956
        %v973 = vadd.f32 %v813, %v957
        %v974 = vadd.f32 %v814, %v958
        %v975 = vadd.f32 %v815, %v959
        %v976 = vadd.f32 %v816, %v960
        %v977 = vadd.f32 %v817, %v961
        %v978 = vld [vmem:[%s1] sm:$0xff]
        %v979 = vld [vmem:[%s1 + $0x8] sm:$0xff]
        %vm980 = vcmask 130048
        %v982 = vsel %vm980, %v658, 0
        %v985 = vsel %vm980, %v659, 0
        %v988 = vsel %vm980, %v660, 0
        %v991 = vsel %vm980, %v661, 0
        %v994 = vsel %vm980, %v662, 0
        %v997 = vsel %vm980, %v663, 0
        %v1000 = vsel %vm980, %v664, 0
        %v1003 = vsel %vm980, %v665, 0
        %v1006 = vsel %vm980, %v666, 0
        %v1009 = vsel %vm980, %v667, 0
        %v1012 = vsel %vm980, %v668, 0
        %v1015 = vsel %vm980, %v669, 0
        %v1018 = vsel %vm980, %v670, 0
        %v1021 = vsel %vm980, %v671, 0
        %v1024 = vsel %vm980, %v672, 0
        %v1027 = vsel %vm980, %v673, 0
        %1029 = vmatprep.subr.mxu0 0.0
        %1030 = vmatpush1.msra.mxu0 0.0
        %1031 = vmatprep.subr.mxu0 0.0
        %1032 = vmatpush1.msra.mxu0 0.0
        %1033 = vmatprep.subr.mxu0 0.0
        %1034 = vmatpush1.msra.mxu0 0.0
        %1035 = vmatprep.subr.mxu0 0.0
        %1036 = vmatpush1.msra.mxu0 0.0
        %1037 = vmatprep.subr.mxu0 0.0
        %1038 = vmatpush1.msra.mxu0 0.0
        %1039 = vmatprep.subr.mxu0 0.0
        %1040 = vmatpush1.msra.mxu0 0.0
        %1041 = vmatprep.subr.mxu0 0.0
        %1042 = vmatpush1.msra.mxu0 0.0
        %1043 = vmatprep.subr.mxu0 0.0
        %1044 = vmatpush1.msra.mxu0 0.0
        %1045 = vmatprep.subr.mxu0 0.0
        %1046 = vmatpush1.msra.mxu0 0.0
        %1047 = vmatprep.subr.mxu0 0.0
        %1048 = vmatpush1.msra.mxu0 0.0
        %1049 = vmatprep.subr.mxu0 0.0
        %1050 = vmatpush1.msra.mxu0 0.0
        %1051 = vmatprep.subr.mxu0 0.0
        %1052 = vmatpush1.msra.mxu0 0.0
        %1053 = vmatprep.subr.mxu0 0.0
        %1054 = vmatpush1.msra.mxu0 0.0
        %1055 = vmatprep.subr.mxu0 0.0
        %1056 = vmatpush1.msra.mxu0 0.0
        %1057 = vmatprep.subr.mxu0 0.0
        %1058 = vmatpush1.msra.mxu0 %v979
        %1059 = vmatprep.subr.mxu0 0.0
        %1060 = vmatpush1.msra.mxu0 %v978
        %1061 = vmatprep.subr.mxu0 0.0
        %1062 = vmatpush2.msra.mxu0 0.0
        %1063 = vmatprep.subr.mxu0 0.0
        %1064 = vmatpush2.msra.mxu0 0.0
        %1065 = vmatprep.subr.mxu0 0.0
        %1066 = vmatpush2.msra.mxu0 0.0
        %1067 = vmatprep.subr.mxu0 0.0
        %1068 = vmatpush2.msra.mxu0 0.0
        %1069 = vmatprep.subr.mxu0 0.0
        %1070 = vmatpush2.msra.mxu0 0.0
        %1071 = vmatprep.subr.mxu0 0.0
        %1072 = vmatpush2.msra.mxu0 0.0
        %1073 = vmatprep.subr.mxu0 0.0
        %1074 = vmatpush2.msra.mxu0 0.0
        %1075 = vmatprep.subr.mxu0 0.0
        %1076 = vmatpush2.msra.mxu0 0.0
        %1077 = vmatprep.subr.mxu0 0.0
        %1078 = vmatpush2.msra.mxu0 0.0
        %1079 = vmatprep.subr.mxu0 0.0
        %1080 = vmatpush2.msra.mxu0 0.0
        %1081 = vmatprep.subr.mxu0 0.0
        %1082 = vmatpush2.msra.mxu0 0.0
        %1083 = vmatprep.subr.mxu0 0.0
        %1084 = vmatpush2.msra.mxu0 0.0
        %1085 = vmatprep.subr.mxu0 0.0
        %1086 = vmatpush2.msra.mxu0 0.0
        %1087 = vmatprep.subr.mxu0 0.0
        %1088 = vmatpush2.msra.mxu0 0.0
        %1089 = vmatprep.subr.mxu0 0.0
        %1090 = vmatpush2.msra.mxu0 0.0
        %1091 = vmatprep.subr.mxu0 0.0
        %1092 = vmatpush2.msra.mxu0 0.0
        %1093 = vmatprep.mubr.f32.mxu0 0.0
        %1094 = vmatmul.mubr.f32.gmra.mxu0 %v982
        %v1095 = vpop.f32.mrf.mxu0
        %v1096 = vadd.f32 0.0, %v1095
        %v1097 = vpop.f32.mrf.mxu0
        %1098 = vmatprep.mubr.f32.mxu0 0.0
        %1099 = vmatmul.mubr.f32.gmra.mxu0 %v985
        %v1100 = vpop.f32.mrf.mxu0
        %v1101 = vadd.f32 0.0, %v1100
        %v1102 = vpop.f32.mrf.mxu0
        %1103 = vmatprep.mubr.f32.mxu0 0.0
        %1104 = vmatmul.mubr.f32.gmra.mxu0 %v988
        %v1105 = vpop.f32.mrf.mxu0
        %v1106 = vadd.f32 0.0, %v1105
        %v1107 = vpop.f32.mrf.mxu0
        %1108 = vmatprep.mubr.f32.mxu0 0.0
        %1109 = vmatmul.mubr.f32.gmra.mxu0 %v991
        %v1110 = vpop.f32.mrf.mxu0
        %v1111 = vadd.f32 0.0, %v1110
        %v1112 = vpop.f32.mrf.mxu0
        %1113 = vmatprep.mubr.f32.mxu0 0.0
        %1114 = vmatmul.mubr.f32.gmra.mxu0 %v994
        %v1115 = vpop.f32.mrf.mxu0
        %v1116 = vadd.f32 0.0, %v1115
        %v1117 = vpop.f32.mrf.mxu0
        %1118 = vmatprep.mubr.f32.mxu0 0.0
        %1119 = vmatmul.mubr.f32.gmra.mxu0 %v997
        %v1120 = vpop.f32.mrf.mxu0
        %v1121 = vadd.f32 0.0, %v1120
        %v1122 = vpop.f32.mrf.mxu0
        %1123 = vmatprep.mubr.f32.mxu0 0.0
        %1124 = vmatmul.mubr.f32.gmra.mxu0 %v1000
        %v1125 = vpop.f32.mrf.mxu0
        %v1126 = vadd.f32 0.0, %v1125
        %v1127 = vpop.f32.mrf.mxu0
        %1128 = vmatprep.mubr.f32.mxu0 0.0
        %1129 = vmatmul.mubr.f32.gmra.mxu0 %v1003
        %v1130 = vpop.f32.mrf.mxu0
        %v1131 = vadd.f32 0.0, %v1130
        %v1132 = vpop.f32.mrf.mxu0
        %1133 = vmatprep.mubr.f32.mxu0 0.0
        %1134 = vmatmul.mubr.f32.gmra.mxu0 %v1006
        %v1135 = vpop.f32.mrf.mxu0
        %v1136 = vadd.f32 0.0, %v1135
        %v1137 = vpop.f32.mrf.mxu0
        %1138 = vmatprep.mubr.f32.mxu0 0.0
        %1139 = vmatmul.mubr.f32.gmra.mxu0 %v1009
        %v1140 = vpop.f32.mrf.mxu0
        %v1141 = vadd.f32 0.0, %v1140
        %v1142 = vpop.f32.mrf.mxu0
        %1143 = vmatprep.mubr.f32.mxu0 0.0
        %1144 = vmatmul.mubr.f32.gmra.mxu0 %v1012
        %v1145 = vpop.f32.mrf.mxu0
        %v1146 = vadd.f32 0.0, %v1145
        %v1147 = vpop.f32.mrf.mxu0
        %1148 = vmatprep.mubr.f32.mxu0 0.0
        %1149 = vmatmul.mubr.f32.gmra.mxu0 %v1015
        %v1150 = vpop.f32.mrf.mxu0
        %v1151 = vadd.f32 0.0, %v1150
        %v1152 = vpop.f32.mrf.mxu0
        %1153 = vmatprep.mubr.f32.mxu0 0.0
        %1154 = vmatmul.mubr.f32.gmra.mxu0 %v1018
        %v1155 = vpop.f32.mrf.mxu0
        %v1156 = vadd.f32 0.0, %v1155
        %v1157 = vpop.f32.mrf.mxu0
        %1158 = vmatprep.mubr.f32.mxu0 0.0
        %1159 = vmatmul.mubr.f32.gmra.mxu0 %v1021
        %v1160 = vpop.f32.mrf.mxu0
        %v1161 = vadd.f32 0.0, %v1160
        %v1162 = vpop.f32.mrf.mxu0
        %1163 = vmatprep.mubr.f32.mxu0 0.0
        %1164 = vmatmul.mubr.f32.gmra.mxu0 %v1024
        %v1165 = vpop.f32.mrf.mxu0
        %v1166 = vadd.f32 0.0, %v1165
        %v1167 = vpop.f32.mrf.mxu0
        %1168 = vmatprep.mubr.f32.mxu0 0.0
        %1169 = vmatmul.mubr.f32.gmra.mxu0 %v1027
        %v1170 = vpop.f32.mrf.mxu0
        %v1171 = vadd.f32 0.0, %v1170
        %v1172 = vpop.f32.mrf.mxu0
        %1173 = vdwg.mxu0
        %v1174 = vmul.f32 %v962, %v1096
        %v1175 = vmul.f32 %v963, %v1101
        %v1176 = vmul.f32 %v964, %v1106
        %v1177 = vmul.f32 %v965, %v1111
        %v1178 = vmul.f32 %v966, %v1116
        %v1179 = vmul.f32 %v967, %v1121
        %v1180 = vmul.f32 %v968, %v1126
        %v1181 = vmul.f32 %v969, %v1131
        %v1182 = vmul.f32 %v970, %v1136
        %v1183 = vmul.f32 %v971, %v1141
        %v1184 = vmul.f32 %v972, %v1146
        %v1185 = vmul.f32 %v973, %v1151
        %v1186 = vmul.f32 %v974, %v1156
        %v1187 = vmul.f32 %v975, %v1161
        %v1188 = vmul.f32 %v976, %v1166
        %v1189 = vmul.f32 %v977, %v1171
        %v1190 = vsel %vm980, %v1174, 0.0
        %1191 = vadd.xlane.f32.xlu0 %v1190
        %v1192 = vpop.xlane.xlu0 %1191
        %v1193 = vsel %vm980, %v1175, 0.0
        %1194 = vadd.xlane.f32.xlu0 %v1193
        %v1195 = vpop.xlane.xlu0 %1194
        %v1196 = vsel %vm980, %v1176, 0.0
        %1197 = vadd.xlane.f32.xlu0 %v1196
        %v1198 = vpop.xlane.xlu0 %1197
        %v1199 = vsel %vm980, %v1177, 0.0
        %1200 = vadd.xlane.f32.xlu0 %v1199
        %v1201 = vpop.xlane.xlu0 %1200
        %v1202 = vsel %vm980, %v1178, 0.0
        %1203 = vadd.xlane.f32.xlu0 %v1202
        %v1204 = vpop.xlane.xlu0 %1203
        %v1205 = vsel %vm980, %v1179, 0.0
        %1206 = vadd.xlane.f32.xlu0 %v1205
        %v1207 = vpop.xlane.xlu0 %1206
        %v1208 = vsel %vm980, %v1180, 0.0
        %1209 = vadd.xlane.f32.xlu0 %v1208
        %v1210 = vpop.xlane.xlu0 %1209
        %v1211 = vsel %vm980, %v1181, 0.0
        %1212 = vadd.xlane.f32.xlu0 %v1211
        %v1213 = vpop.xlane.xlu0 %1212
        %v1214 = vsel %vm980, %v1182, 0.0
        %1215 = vadd.xlane.f32.xlu0 %v1214
        %v1216 = vpop.xlane.xlu0 %1215
        %v1217 = vsel %vm980, %v1183, 0.0
        %1218 = vadd.xlane.f32.xlu0 %v1217
        %v1219 = vpop.xlane.xlu0 %1218
        %v1220 = vsel %vm980, %v1184, 0.0
        %1221 = vadd.xlane.f32.xlu0 %v1220
        %v1222 = vpop.xlane.xlu0 %1221
        %v1223 = vsel %vm980, %v1185, 0.0
        %1224 = vadd.xlane.f32.xlu0 %v1223
        %v1225 = vpop.xlane.xlu0 %1224
        %v1226 = vsel %vm980, %v1186, 0.0
        %1227 = vadd.xlane.f32.xlu0 %v1226
        %v1228 = vpop.xlane.xlu0 %1227
        %v1229 = vsel %vm980, %v1187, 0.0
        %1230 = vadd.xlane.f32.xlu0 %v1229
        %v1231 = vpop.xlane.xlu0 %1230
        %v1232 = vsel %vm980, %v1188, 0.0
        %1233 = vadd.xlane.f32.xlu0 %v1232
        %v1234 = vpop.xlane.xlu0 %1233
        %v1235 = vsel %vm980, %v1189, 0.0
        %1236 = vadd.xlane.f32.xlu0 %v1235
        %v1237 = vpop.xlane.xlu0 %1236
        %1254 = vrot.lane.b32.xlu0 %v1096, 112
        %v1255 = vpop.permute.xlu0 %1254
        %1256 = vrot.lane.b32.xlu0 %v1101, 112
        %v1257 = vpop.permute.xlu0 %1256
        %1258 = vrot.lane.b32.xlu0 %v1106, 112
        %v1259 = vpop.permute.xlu0 %1258
        %1260 = vrot.lane.b32.xlu0 %v1111, 112
        %v1261 = vpop.permute.xlu0 %1260
        %1262 = vrot.lane.b32.xlu0 %v1116, 112
        %v1263 = vpop.permute.xlu0 %1262
        %1264 = vrot.lane.b32.xlu0 %v1121, 112
        %v1265 = vpop.permute.xlu0 %1264
        %1266 = vrot.lane.b32.xlu0 %v1126, 112
        %v1267 = vpop.permute.xlu0 %1266
        %1268 = vrot.lane.b32.xlu0 %v1131, 112
        %v1269 = vpop.permute.xlu0 %1268
        %1270 = vrot.lane.b32.xlu0 %v1136, 112
        %v1271 = vpop.permute.xlu0 %1270
        %1272 = vrot.lane.b32.xlu0 %v1141, 112
        %v1273 = vpop.permute.xlu0 %1272
        %1274 = vrot.lane.b32.xlu0 %v1146, 112
        %v1275 = vpop.permute.xlu0 %1274
        %1276 = vrot.lane.b32.xlu0 %v1151, 112
        %v1277 = vpop.permute.xlu0 %1276
        %1278 = vrot.lane.b32.xlu0 %v1156, 112
        %v1279 = vpop.permute.xlu0 %1278
        %1280 = vrot.lane.b32.xlu0 %v1161, 112
        %v1281 = vpop.permute.xlu0 %1280
        %1282 = vrot.lane.b32.xlu0 %v1166, 112
        %v1283 = vpop.permute.xlu0 %1282
        %1284 = vrot.lane.b32.xlu0 %v1171, 112
        %v1285 = vpop.permute.xlu0 %1284
        %v1302 = vmul.f32 %v962, %v1255
        %v1303 = vmul.f32 %v963, %v1257
        %v1304 = vmul.f32 %v964, %v1259
        %v1305 = vmul.f32 %v965, %v1261
        %v1306 = vmul.f32 %v966, %v1263
        %v1307 = vmul.f32 %v967, %v1265
        %v1308 = vmul.f32 %v968, %v1267
        %v1309 = vmul.f32 %v969, %v1269
        %v1310 = vmul.f32 %v970, %v1271
        %v1311 = vmul.f32 %v971, %v1273
        %v1312 = vmul.f32 %v972, %v1275
        %v1313 = vmul.f32 %v973, %v1277
        %v1314 = vmul.f32 %v974, %v1279
        %v1315 = vmul.f32 %v975, %v1281
        %v1316 = vmul.f32 %v976, %v1283
        %v1317 = vmul.f32 %v977, %v1285
        %v1318 = vsel %vm980, %v1302, 0.0
        %1319 = vadd.xlane.f32.xlu0 %v1318
        %v1320 = vpop.xlane.xlu0 %1319
        %v1321 = vsel %vm980, %v1303, 0.0
        %1322 = vadd.xlane.f32.xlu0 %v1321
        %v1323 = vpop.xlane.xlu0 %1322
        %v1324 = vsel %vm980, %v1304, 0.0
        %1325 = vadd.xlane.f32.xlu0 %v1324
        %v1326 = vpop.xlane.xlu0 %1325
        %v1327 = vsel %vm980, %v1305, 0.0
        %1328 = vadd.xlane.f32.xlu0 %v1327
        %v1329 = vpop.xlane.xlu0 %1328
        %v1330 = vsel %vm980, %v1306, 0.0
        %1331 = vadd.xlane.f32.xlu0 %v1330
        %v1332 = vpop.xlane.xlu0 %1331
        %v1333 = vsel %vm980, %v1307, 0.0
        %1334 = vadd.xlane.f32.xlu0 %v1333
        %v1335 = vpop.xlane.xlu0 %1334
        %v1336 = vsel %vm980, %v1308, 0.0
        %1337 = vadd.xlane.f32.xlu0 %v1336
        %v1338 = vpop.xlane.xlu0 %1337
        %v1339 = vsel %vm980, %v1309, 0.0
        %1340 = vadd.xlane.f32.xlu0 %v1339
        %v1341 = vpop.xlane.xlu0 %1340
        %v1342 = vsel %vm980, %v1310, 0.0
        %1343 = vadd.xlane.f32.xlu0 %v1342
        %v1344 = vpop.xlane.xlu0 %1343
        %v1345 = vsel %vm980, %v1311, 0.0
        %1346 = vadd.xlane.f32.xlu0 %v1345
        %v1347 = vpop.xlane.xlu0 %1346
        %v1348 = vsel %vm980, %v1312, 0.0
        %1349 = vadd.xlane.f32.xlu0 %v1348
        %v1350 = vpop.xlane.xlu0 %1349
        %v1351 = vsel %vm980, %v1313, 0.0
        %1352 = vadd.xlane.f32.xlu0 %v1351
        %v1353 = vpop.xlane.xlu0 %1352
        %v1354 = vsel %vm980, %v1314, 0.0
        %1355 = vadd.xlane.f32.xlu0 %v1354
        %v1356 = vpop.xlane.xlu0 %1355
        %v1357 = vsel %vm980, %v1315, 0.0
        %1358 = vadd.xlane.f32.xlu0 %v1357
        %v1359 = vpop.xlane.xlu0 %1358
        %v1360 = vsel %vm980, %v1316, 0.0
        %1361 = vadd.xlane.f32.xlu0 %v1360
        %v1362 = vpop.xlane.xlu0 %1361
        %v1363 = vsel %vm980, %v1317, 0.0
        %1364 = vadd.xlane.f32.xlu0 %v1363
        %v1365 = vpop.xlane.xlu0 %1364
        %1366 = vrot.lane.b32.xlu0 %v1096, 96
        %v1367 = vpop.permute.xlu0 %1366
        %1368 = vrot.lane.b32.xlu0 %v1101, 96
        %v1369 = vpop.permute.xlu0 %1368
        %1370 = vrot.lane.b32.xlu0 %v1106, 96
        %v1371 = vpop.permute.xlu0 %1370
        %1372 = vrot.lane.b32.xlu0 %v1111, 96
        %v1373 = vpop.permute.xlu0 %1372
        %1374 = vrot.lane.b32.xlu0 %v1116, 96
        %v1375 = vpop.permute.xlu0 %1374
        %1376 = vrot.lane.b32.xlu0 %v1121, 96
        %v1377 = vpop.permute.xlu0 %1376
        %1378 = vrot.lane.b32.xlu0 %v1126, 96
        %v1379 = vpop.permute.xlu0 %1378
        %1380 = vrot.lane.b32.xlu0 %v1131, 96
        %v1381 = vpop.permute.xlu0 %1380
        %1382 = vrot.lane.b32.xlu0 %v1136, 96
        %v1383 = vpop.permute.xlu0 %1382
        %1384 = vrot.lane.b32.xlu0 %v1141, 96
        %v1385 = vpop.permute.xlu0 %1384
        %1386 = vrot.lane.b32.xlu0 %v1146, 96
        %v1387 = vpop.permute.xlu0 %1386
        %1388 = vrot.lane.b32.xlu0 %v1151, 96
        %v1389 = vpop.permute.xlu0 %1388
        %1390 = vrot.lane.b32.xlu0 %v1156, 96
        %v1391 = vpop.permute.xlu0 %1390
        %1392 = vrot.lane.b32.xlu0 %v1161, 96
        %v1393 = vpop.permute.xlu0 %1392
        %1394 = vrot.lane.b32.xlu0 %v1166, 96
        %v1395 = vpop.permute.xlu0 %1394
        %1396 = vrot.lane.b32.xlu0 %v1171, 96
        %v1397 = vpop.permute.xlu0 %1396
        %v1414 = vmul.f32 %v962, %v1367
        %v1415 = vmul.f32 %v963, %v1369
        %v1416 = vmul.f32 %v964, %v1371
        %v1417 = vmul.f32 %v965, %v1373
        %v1418 = vmul.f32 %v966, %v1375
        %v1419 = vmul.f32 %v967, %v1377
        %v1420 = vmul.f32 %v968, %v1379
        %v1421 = vmul.f32 %v969, %v1381
        %v1422 = vmul.f32 %v970, %v1383
        %v1423 = vmul.f32 %v971, %v1385
        %v1424 = vmul.f32 %v972, %v1387
        %v1425 = vmul.f32 %v973, %v1389
        %v1426 = vmul.f32 %v974, %v1391
        %v1427 = vmul.f32 %v975, %v1393
        %v1428 = vmul.f32 %v976, %v1395
        %v1429 = vmul.f32 %v977, %v1397
        %v1430 = vsel %vm980, %v1414, 0.0
        %1431 = vadd.xlane.f32.xlu0 %v1430
        %v1432 = vpop.xlane.xlu0 %1431
        %v1433 = vsel %vm980, %v1415, 0.0
        %1434 = vadd.xlane.f32.xlu0 %v1433
        %v1435 = vpop.xlane.xlu0 %1434
        %v1436 = vsel %vm980, %v1416, 0.0
        %1437 = vadd.xlane.f32.xlu0 %v1436
        %v1438 = vpop.xlane.xlu0 %1437
        %v1439 = vsel %vm980, %v1417, 0.0
        %1440 = vadd.xlane.f32.xlu0 %v1439
        %v1441 = vpop.xlane.xlu0 %1440
        %v1442 = vsel %vm980, %v1418, 0.0
        %1443 = vadd.xlane.f32.xlu0 %v1442
        %v1444 = vpop.xlane.xlu0 %1443
        %v1445 = vsel %vm980, %v1419, 0.0
        %1446 = vadd.xlane.f32.xlu0 %v1445
        %v1447 = vpop.xlane.xlu0 %1446
        %v1448 = vsel %vm980, %v1420, 0.0
        %1449 = vadd.xlane.f32.xlu0 %v1448
        %v1450 = vpop.xlane.xlu0 %1449
        %v1451 = vsel %vm980, %v1421, 0.0
        %1452 = vadd.xlane.f32.xlu0 %v1451
        %v1453 = vpop.xlane.xlu0 %1452
        %v1454 = vsel %vm980, %v1422, 0.0
        %1455 = vadd.xlane.f32.xlu0 %v1454
        %v1456 = vpop.xlane.xlu0 %1455
        %v1457 = vsel %vm980, %v1423, 0.0
        %1458 = vadd.xlane.f32.xlu0 %v1457
        %v1459 = vpop.xlane.xlu0 %1458
        %v1460 = vsel %vm980, %v1424, 0.0
        %1461 = vadd.xlane.f32.xlu0 %v1460
        %v1462 = vpop.xlane.xlu0 %1461
        %v1463 = vsel %vm980, %v1425, 0.0
        %1464 = vadd.xlane.f32.xlu0 %v1463
        %v1465 = vpop.xlane.xlu0 %1464
        %v1466 = vsel %vm980, %v1426, 0.0
        %1467 = vadd.xlane.f32.xlu0 %v1466
        %v1468 = vpop.xlane.xlu0 %1467
        %v1469 = vsel %vm980, %v1427, 0.0
        %1470 = vadd.xlane.f32.xlu0 %v1469
        %v1471 = vpop.xlane.xlu0 %1470
        %v1472 = vsel %vm980, %v1428, 0.0
        %1473 = vadd.xlane.f32.xlu0 %v1472
        %v1474 = vpop.xlane.xlu0 %1473
        %v1475 = vsel %vm980, %v1429, 0.0
        %1476 = vadd.xlane.f32.xlu0 %v1475
        %v1477 = vpop.xlane.xlu0 %1476
        %vm1478 = vcmask 7168
        %v1479 = vsel %vm1478, %v1192, %v1320
        %v1480 = vsel %vm1478, %v1195, %v1323
        %v1481 = vsel %vm1478, %v1198, %v1326
        %v1482 = vsel %vm1478, %v1201, %v1329
        %v1483 = vsel %vm1478, %v1204, %v1332
        %v1484 = vsel %vm1478, %v1207, %v1335
        %v1485 = vsel %vm1478, %v1210, %v1338
        %v1486 = vsel %vm1478, %v1213, %v1341
        %v1487 = vsel %vm1478, %v1216, %v1344
        %v1488 = vsel %vm1478, %v1219, %v1347
        %v1489 = vsel %vm1478, %v1222, %v1350
        %v1490 = vsel %vm1478, %v1225, %v1353
        %v1491 = vsel %vm1478, %v1228, %v1356
        %v1492 = vsel %vm1478, %v1231, %v1359
        %v1493 = vsel %vm1478, %v1234, %v1362
        %v1494 = vsel %vm1478, %v1237, %v1365
        %vm1495 = vcmask 15360
        %v1496 = vsel %vm1495, %v1479, %v1432
        %v1497 = vsel %vm1495, %v1480, %v1435
        %v1498 = vsel %vm1495, %v1481, %v1438
        %v1499 = vsel %vm1495, %v1482, %v1441
        %v1500 = vsel %vm1495, %v1483, %v1444
        %v1501 = vsel %vm1495, %v1484, %v1447
        %v1502 = vsel %vm1495, %v1485, %v1450
        %v1503 = vsel %vm1495, %v1486, %v1453
        %v1504 = vsel %vm1495, %v1487, %v1456
        %v1505 = vsel %vm1495, %v1488, %v1459
        %v1506 = vsel %vm1495, %v1489, %v1462
        %v1507 = vsel %vm1495, %v1490, %v1465
        %v1508 = vsel %vm1495, %v1491, %v1468
        %v1509 = vsel %vm1495, %v1492, %v1471
        %v1510 = vsel %vm1495, %v1493, %v1474
        %v1511 = vsel %vm1495, %v1494, %v1477
        %1528 = vrot.lane.b32.xlu0 %v144, 124
        %v1529 = vpop.permute.xlu0 %1528
        %1530 = vrot.lane.b32.xlu0 %v145, 124
        %v1531 = vpop.permute.xlu0 %1530
        %1532 = vrot.lane.b32.xlu0 %v146, 124
        %v1533 = vpop.permute.xlu0 %1532
        %1534 = vrot.lane.b32.xlu0 %v147, 124
        %v1535 = vpop.permute.xlu0 %1534
        %1536 = vrot.lane.b32.xlu0 %v148, 124
        %v1537 = vpop.permute.xlu0 %1536
        %1538 = vrot.lane.b32.xlu0 %v149, 124
        %v1539 = vpop.permute.xlu0 %1538
        %1540 = vrot.lane.b32.xlu0 %v150, 124
        %v1541 = vpop.permute.xlu0 %1540
        %1542 = vrot.lane.b32.xlu0 %v151, 124
        %v1543 = vpop.permute.xlu0 %1542
        %1544 = vrot.lane.b32.xlu0 %v152, 124
        %v1545 = vpop.permute.xlu0 %1544
        %1546 = vrot.lane.b32.xlu0 %v153, 124
        %v1547 = vpop.permute.xlu0 %1546
        %1548 = vrot.lane.b32.xlu0 %v154, 124
        %v1549 = vpop.permute.xlu0 %1548
        %1550 = vrot.lane.b32.xlu0 %v155, 124
        %v1551 = vpop.permute.xlu0 %1550
        %1552 = vrot.lane.b32.xlu0 %v156, 124
        %v1553 = vpop.permute.xlu0 %1552
        %1554 = vrot.lane.b32.xlu0 %v157, 124
        %v1555 = vpop.permute.xlu0 %1554
        %1556 = vrot.lane.b32.xlu0 %v158, 124
        %v1557 = vpop.permute.xlu0 %1556
        %1558 = vrot.lane.b32.xlu0 %v159, 124
        %v1559 = vpop.permute.xlu0 %1558
        %v1576 = vsub.f32 %v1496, %v1529
        %v1577 = vsub.f32 %v1497, %v1531
        %v1578 = vsub.f32 %v1498, %v1533
        %v1579 = vsub.f32 %v1499, %v1535
        %v1580 = vsub.f32 %v1500, %v1537
        %v1581 = vsub.f32 %v1501, %v1539
        %v1582 = vsub.f32 %v1502, %v1541
        %v1583 = vsub.f32 %v1503, %v1543
        %v1584 = vsub.f32 %v1504, %v1545
        %v1585 = vsub.f32 %v1505, %v1547
        %v1586 = vsub.f32 %v1506, %v1549
        %v1587 = vsub.f32 %v1507, %v1551
        %v1588 = vsub.f32 %v1508, %v1553
        %v1589 = vsub.f32 %v1509, %v1555
        %v1590 = vsub.f32 %v1510, %v1557
        %v1591 = vsub.f32 %v1511, %v1559
        %1592 = vset.pattern.permute.xlu0 13
        %1593 = vperm.xlu0 %1592, %v144
        %v1594 = vpop.permute.xlu0 %1593
        %1596 = vset.pattern.permute.xlu0 13
        %1597 = vperm.xlu0 %1596, %v145
        %v1598 = vpop.permute.xlu0 %1597
        %1600 = vset.pattern.permute.xlu0 13
        %1601 = vperm.xlu0 %1600, %v146
        %v1602 = vpop.permute.xlu0 %1601
        %1604 = vset.pattern.permute.xlu0 13
        %1605 = vperm.xlu0 %1604, %v147
        %v1606 = vpop.permute.xlu0 %1605
        %1608 = vset.pattern.permute.xlu0 13
        %1609 = vperm.xlu0 %1608, %v148
        %v1610 = vpop.permute.xlu0 %1609
        %1612 = vset.pattern.permute.xlu0 13
        %1613 = vperm.xlu0 %1612, %v149
        %v1614 = vpop.permute.xlu0 %1613
        %1616 = vset.pattern.permute.xlu0 13
        %1617 = vperm.xlu0 %1616, %v150
        %v1618 = vpop.permute.xlu0 %1617
        %1620 = vset.pattern.permute.xlu0 13
        %1621 = vperm.xlu0 %1620, %v151
        %v1622 = vpop.permute.xlu0 %1621
        %1624 = vset.pattern.permute.xlu0 13
        %1625 = vperm.xlu0 %1624, %v152
        %v1626 = vpop.permute.xlu0 %1625
        %1628 = vset.pattern.permute.xlu0 13
        %1629 = vperm.xlu0 %1628, %v153
        %v1630 = vpop.permute.xlu0 %1629
        %1632 = vset.pattern.permute.xlu0 13
        %1633 = vperm.xlu0 %1632, %v154
        %v1634 = vpop.permute.xlu0 %1633
        %1636 = vset.pattern.permute.xlu0 13
        %1637 = vperm.xlu0 %1636, %v155
        %v1638 = vpop.permute.xlu0 %1637
        %1640 = vset.pattern.permute.xlu0 13
        %1641 = vperm.xlu0 %1640, %v156
        %v1642 = vpop.permute.xlu0 %1641
        %1644 = vset.pattern.permute.xlu0 13
        %1645 = vperm.xlu0 %1644, %v157
        %v1646 = vpop.permute.xlu0 %1645
        %1648 = vset.pattern.permute.xlu0 13
        %1649 = vperm.xlu0 %1648, %v158
        %v1650 = vpop.permute.xlu0 %1649
        %1652 = vset.pattern.permute.xlu0 13
        %1653 = vperm.xlu0 %1652, %v159
        %v1654 = vpop.permute.xlu0 %1653
        %v1656 = vmul.f32 %v1576, %v1594
        %v1657 = vmul.f32 %v1577, %v1598
        %v1658 = vmul.f32 %v1578, %v1602
        %v1659 = vmul.f32 %v1579, %v1606
        %v1660 = vmul.f32 %v1580, %v1610
        %v1661 = vmul.f32 %v1581, %v1614
        %v1662 = vmul.f32 %v1582, %v1618
        %v1663 = vmul.f32 %v1583, %v1622
        %v1664 = vmul.f32 %v1584, %v1626
        %v1665 = vmul.f32 %v1585, %v1630
        %v1666 = vmul.f32 %v1586, %v1634
        %v1667 = vmul.f32 %v1587, %v1638
        %v1668 = vmul.f32 %v1588, %v1642
        %v1669 = vmul.f32 %v1589, %v1646
        %v1670 = vmul.f32 %v1590, %v1650
        %v1671 = vmul.f32 %v1591, %v1654
        %v1672 = vld [vmem:[#allocation2] sm:$0x1]
        %v1673 = vmul.f32 %v1656, %v1656
        %v1674 = vmul.f32 %v1657, %v1657
        %v1675 = vmul.f32 %v1658, %v1658
        %v1676 = vmul.f32 %v1659, %v1659
        %v1677 = vmul.f32 %v1660, %v1660
        %v1678 = vmul.f32 %v1661, %v1661
        %v1679 = vmul.f32 %v1662, %v1662
        %v1680 = vmul.f32 %v1663, %v1663
        %v1681 = vmul.f32 %v1664, %v1664
        %v1682 = vmul.f32 %v1665, %v1665
        %v1683 = vmul.f32 %v1666, %v1666
        %v1684 = vmul.f32 %v1667, %v1667
        %v1685 = vmul.f32 %v1668, %v1668
        %v1686 = vmul.f32 %v1669, %v1669
        %v1687 = vmul.f32 %v1670, %v1670
        %v1688 = vmul.f32 %v1671, %v1671
        %vm1689 = vcmask 23552
        %v1690 = vsel %vm1689, %v1673, 0.0
        %v1691 = vsel %vm1689, %v1674, 0.0
        %v1692 = vadd.f32 %v1690, %v1691
        %v1693 = vsel %vm1689, %v1675, 0.0
        %v1694 = vadd.f32 %v1692, %v1693
        %v1695 = vsel %vm1689, %v1676, 0.0
        %v1696 = vadd.f32 %v1694, %v1695
        %v1697 = vsel %vm1689, %v1677, 0.0
        %v1698 = vadd.f32 %v1696, %v1697
        %v1699 = vsel %vm1689, %v1678, 0.0
        %v1700 = vadd.f32 %v1698, %v1699
        %v1701 = vsel %vm1689, %v1679, 0.0
        %v1702 = vadd.f32 %v1700, %v1701
        %v1703 = vsel %vm1689, %v1680, 0.0
        %v1704 = vadd.f32 %v1702, %v1703
        %v1705 = vsel %vm1689, %v1681, 0.0
        %v1706 = vadd.f32 %v1704, %v1705
        %v1707 = vsel %vm1689, %v1682, 0.0
        %v1708 = vadd.f32 %v1706, %v1707
        %v1709 = vsel %vm1689, %v1683, 0.0
        %v1710 = vadd.f32 %v1708, %v1709
        %v1711 = vsel %vm1689, %v1684, 0.0
        %v1712 = vadd.f32 %v1710, %v1711
        %v1713 = vsel %vm1689, %v1685, 0.0
        %v1714 = vadd.f32 %v1712, %v1713
        %v1715 = vsel %vm1689, %v1686, 0.0
        %v1716 = vadd.f32 %v1714, %v1715
        %v1717 = vsel %vm1689, %v1687, 0.0
        %v1718 = vadd.f32 %v1716, %v1717
        %v1719 = vsel %vm1689, %v1688, 0.0
        %v1720 = vadd.f32 %v1718, %v1719
        %v1721 = vrot.slane %v1720, 4
        %v1722 = vadd.f32 %v1720, %v1721
        %v1723 = vrot.slane %v1722, 2
        %v1724 = vadd.f32 %v1722, %v1723
        %v1725 = vrot.slane %v1724, 1
        %v1726 = vadd.f32 %v1724, %v1725
        %v1727 = vadd.f32 %v1672, %v1726
        %vm1728 = vcmask 16384
        %1729 = vst.msk [vmem:[#allocation2] sm:$0x1] %vm1728, %v1727
        %v1730 = vld [vmem:[#allocation4] sm:$0x1]
        %1731 = vrot.lane.b32.xlu0 %v144, 126
        %v1732 = vpop.permute.xlu0 %1731
        %1733 = vrot.lane.b32.xlu0 %v145, 126
        %v1734 = vpop.permute.xlu0 %1733
        %1735 = vrot.lane.b32.xlu0 %v146, 126
        %v1736 = vpop.permute.xlu0 %1735
        %1737 = vrot.lane.b32.xlu0 %v147, 126
        %v1738 = vpop.permute.xlu0 %1737
        %1739 = vrot.lane.b32.xlu0 %v148, 126
        %v1740 = vpop.permute.xlu0 %1739
        %1741 = vrot.lane.b32.xlu0 %v149, 126
        %v1742 = vpop.permute.xlu0 %1741
        %1743 = vrot.lane.b32.xlu0 %v150, 126
        %v1744 = vpop.permute.xlu0 %1743
        %1745 = vrot.lane.b32.xlu0 %v151, 126
        %v1746 = vpop.permute.xlu0 %1745
        %1747 = vrot.lane.b32.xlu0 %v152, 126
        %v1748 = vpop.permute.xlu0 %1747
        %1749 = vrot.lane.b32.xlu0 %v153, 126
        %v1750 = vpop.permute.xlu0 %1749
        %1751 = vrot.lane.b32.xlu0 %v154, 126
        %v1752 = vpop.permute.xlu0 %1751
        %1753 = vrot.lane.b32.xlu0 %v155, 126
        %v1754 = vpop.permute.xlu0 %1753
        %1755 = vrot.lane.b32.xlu0 %v156, 126
        %v1756 = vpop.permute.xlu0 %1755
        %1757 = vrot.lane.b32.xlu0 %v157, 126
        %v1758 = vpop.permute.xlu0 %1757
        %1759 = vrot.lane.b32.xlu0 %v158, 126
        %v1760 = vpop.permute.xlu0 %1759
        %1761 = vrot.lane.b32.xlu0 %v159, 126
        %v1762 = vpop.permute.xlu0 %1761
        %v1779 = vsub.f32 %v144, %v1732
        %v1780 = vsub.f32 %v145, %v1734
        %v1781 = vsub.f32 %v146, %v1736
        %v1782 = vsub.f32 %v147, %v1738
        %v1783 = vsub.f32 %v148, %v1740
        %v1784 = vsub.f32 %v149, %v1742
        %v1785 = vsub.f32 %v150, %v1744
        %v1786 = vsub.f32 %v151, %v1746
        %v1787 = vsub.f32 %v152, %v1748
        %v1788 = vsub.f32 %v153, %v1750
        %v1789 = vsub.f32 %v154, %v1752
        %v1790 = vsub.f32 %v155, %v1754
        %v1791 = vsub.f32 %v156, %v1756
        %v1792 = vsub.f32 %v157, %v1758
        %v1793 = vsub.f32 %v158, %v1760
        %v1794 = vsub.f32 %v159, %v1762
        %v1795 = vand.u32 2147483647, %v1779
        %v1796 = vand.u32 2147483647, %v1780
        %v1797 = vand.u32 2147483647, %v1781
        %v1798 = vand.u32 2147483647, %v1782
        %v1799 = vand.u32 2147483647, %v1783
        %v1800 = vand.u32 2147483647, %v1784
        %v1801 = vand.u32 2147483647, %v1785
        %v1802 = vand.u32 2147483647, %v1786
        %v1803 = vand.u32 2147483647, %v1787
        %v1804 = vand.u32 2147483647, %v1788
        %v1805 = vand.u32 2147483647, %v1789
        %v1806 = vand.u32 2147483647, %v1790
        %v1807 = vand.u32 2147483647, %v1791
        %v1808 = vand.u32 2147483647, %v1792
        %v1809 = vand.u32 2147483647, %v1793
        %v1810 = vand.u32 2147483647, %v1794
        %v1811 = vmul.f32 %v1795, %v1594
        %v1812 = vmul.f32 %v1796, %v1598
        %v1813 = vmul.f32 %v1797, %v1602
        %v1814 = vmul.f32 %v1798, %v1606
        %v1815 = vmul.f32 %v1799, %v1610
        %v1816 = vmul.f32 %v1800, %v1614
        %v1817 = vmul.f32 %v1801, %v1618
        %v1818 = vmul.f32 %v1802, %v1622
        %v1819 = vmul.f32 %v1803, %v1626
        %v1820 = vmul.f32 %v1804, %v1630
        %v1821 = vmul.f32 %v1805, %v1634
        %v1822 = vmul.f32 %v1806, %v1638
        %v1823 = vmul.f32 %v1807, %v1642
        %v1824 = vmul.f32 %v1808, %v1646
        %v1825 = vmul.f32 %v1809, %v1650
        %v1826 = vmul.f32 %v1810, %v1654
        %v1827 = vsel %vm1495, %v1811, 0.0
        %v1828 = vsel %vm1495, %v1812, 0.0
        %v1829 = vadd.f32 %v1827, %v1828
        %v1830 = vsel %vm1495, %v1813, 0.0
        %v1831 = vadd.f32 %v1829, %v1830
        %v1832 = vsel %vm1495, %v1814, 0.0
        %v1833 = vadd.f32 %v1831, %v1832
        %v1834 = vsel %vm1495, %v1815, 0.0
        %v1835 = vadd.f32 %v1833, %v1834
        %v1836 = vsel %vm1495, %v1816, 0.0
        %v1837 = vadd.f32 %v1835, %v1836
        %v1838 = vsel %vm1495, %v1817, 0.0
        %v1839 = vadd.f32 %v1837, %v1838
        %v1840 = vsel %vm1495, %v1818, 0.0
        %v1841 = vadd.f32 %v1839, %v1840
        %v1842 = vsel %vm1495, %v1819, 0.0
        %v1843 = vadd.f32 %v1841, %v1842
        %v1844 = vsel %vm1495, %v1820, 0.0
        %v1845 = vadd.f32 %v1843, %v1844
        %v1846 = vsel %vm1495, %v1821, 0.0
        %v1847 = vadd.f32 %v1845, %v1846
        %v1848 = vsel %vm1495, %v1822, 0.0
        %v1849 = vadd.f32 %v1847, %v1848
        %v1850 = vsel %vm1495, %v1823, 0.0
        %v1851 = vadd.f32 %v1849, %v1850
        %v1852 = vsel %vm1495, %v1824, 0.0
        %v1853 = vadd.f32 %v1851, %v1852
        %v1854 = vsel %vm1495, %v1825, 0.0
        %v1855 = vadd.f32 %v1853, %v1854
        %v1856 = vsel %vm1495, %v1826, 0.0
        %v1857 = vadd.f32 %v1855, %v1856
        %v1858 = vrot.slane %v1857, 4
        %v1859 = vadd.f32 %v1857, %v1858
        %v1860 = vrot.slane %v1859, 2
        %v1861 = vadd.f32 %v1859, %v1860
        %v1862 = vrot.slane %v1861, 1
        %v1863 = vadd.f32 %v1861, %v1862
        %v1864 = vadd.f32 %v1730, %v1863
        %vm1865 = vcmask 8192
        %1866 = vst.msk [vmem:[#allocation4] sm:$0x1] %vm1865, %v1864
        %1867 = vrot.lane.b32.xlu0 %v144, 3
        %v1868 = vpop.permute.xlu0 %1867
        %1869 = vrot.lane.b32.xlu0 %v145, 3
        %v1870 = vpop.permute.xlu0 %1869
        %1871 = vrot.lane.b32.xlu0 %v146, 3
        %v1872 = vpop.permute.xlu0 %1871
        %1873 = vrot.lane.b32.xlu0 %v147, 3
        %v1874 = vpop.permute.xlu0 %1873
        %1875 = vrot.lane.b32.xlu0 %v148, 3
        %v1876 = vpop.permute.xlu0 %1875
        %1877 = vrot.lane.b32.xlu0 %v149, 3
        %v1878 = vpop.permute.xlu0 %1877
        %1879 = vrot.lane.b32.xlu0 %v150, 3
        %v1880 = vpop.permute.xlu0 %1879
        %1881 = vrot.lane.b32.xlu0 %v151, 3
        %v1882 = vpop.permute.xlu0 %1881
        %1883 = vrot.lane.b32.xlu0 %v152, 3
        %v1884 = vpop.permute.xlu0 %1883
        %1885 = vrot.lane.b32.xlu0 %v153, 3
        %v1886 = vpop.permute.xlu0 %1885
        %1887 = vrot.lane.b32.xlu0 %v154, 3
        %v1888 = vpop.permute.xlu0 %1887
        %1889 = vrot.lane.b32.xlu0 %v155, 3
        %v1890 = vpop.permute.xlu0 %1889
        %1891 = vrot.lane.b32.xlu0 %v156, 3
        %v1892 = vpop.permute.xlu0 %1891
        %1893 = vrot.lane.b32.xlu0 %v157, 3
        %v1894 = vpop.permute.xlu0 %1893
        %1895 = vrot.lane.b32.xlu0 %v158, 3
        %v1896 = vpop.permute.xlu0 %1895
        %1897 = vrot.lane.b32.xlu0 %v159, 3
        %v1898 = vpop.permute.xlu0 %1897
        %v1915 = vsub.f32 %v144, %v1868
        %v1916 = vsub.f32 %v145, %v1870
        %v1917 = vsub.f32 %v146, %v1872
        %v1918 = vsub.f32 %v147, %v1874
        %v1919 = vsub.f32 %v148, %v1876
        %v1920 = vsub.f32 %v149, %v1878
        %v1921 = vsub.f32 %v150, %v1880
        %v1922 = vsub.f32 %v151, %v1882
        %v1923 = vsub.f32 %v152, %v1884
        %v1924 = vsub.f32 %v153, %v1886
        %v1925 = vsub.f32 %v154, %v1888
        %v1926 = vsub.f32 %v155, %v1890
        %v1927 = vsub.f32 %v156, %v1892
        %v1928 = vsub.f32 %v157, %v1894
        %v1929 = vsub.f32 %v158, %v1896
        %v1930 = vsub.f32 %v159, %v1898
        %v1931 = vmul.f32 %v1915, %v1594
        %v1932 = vmul.f32 %v1916, %v1598
        %v1933 = vmul.f32 %v1917, %v1602
        %v1934 = vmul.f32 %v1918, %v1606
        %v1935 = vmul.f32 %v1919, %v1610
        %v1936 = vmul.f32 %v1920, %v1614
        %v1937 = vmul.f32 %v1921, %v1618
        %v1938 = vmul.f32 %v1922, %v1622
        %v1939 = vmul.f32 %v1923, %v1626
        %v1940 = vmul.f32 %v1924, %v1630
        %v1941 = vmul.f32 %v1925, %v1634
        %v1942 = vmul.f32 %v1926, %v1638
        %v1943 = vmul.f32 %v1927, %v1642
        %v1944 = vmul.f32 %v1928, %v1646
        %v1945 = vmul.f32 %v1929, %v1650
        %v1946 = vmul.f32 %v1930, %v1654
        %v1947 = vld [vmem:[#allocation5] sm:$0x1]
        %v1948 = vmul.f32 %v1931, %v1931
        %v1949 = vmul.f32 %v1932, %v1932
        %v1950 = vmul.f32 %v1933, %v1933
        %v1951 = vmul.f32 %v1934, %v1934
        %v1952 = vmul.f32 %v1935, %v1935
        %v1953 = vmul.f32 %v1936, %v1936
        %v1954 = vmul.f32 %v1937, %v1937
        %v1955 = vmul.f32 %v1938, %v1938
        %v1956 = vmul.f32 %v1939, %v1939
        %v1957 = vmul.f32 %v1940, %v1940
        %v1958 = vmul.f32 %v1941, %v1941
        %v1959 = vmul.f32 %v1942, %v1942
        %v1960 = vmul.f32 %v1943, %v1943
        %v1961 = vmul.f32 %v1944, %v1944
        %v1962 = vmul.f32 %v1945, %v1945
        %v1963 = vmul.f32 %v1946, %v1946
        %vm1964 = vcmask 105552
        %v1965 = vsel %vm1964, %v1948, 0.0
        %v1966 = vsel %vm1964, %v1949, 0.0
        %v1967 = vadd.f32 %v1965, %v1966
        %v1968 = vsel %vm1964, %v1950, 0.0
        %v1969 = vadd.f32 %v1967, %v1968
        %v1970 = vsel %vm1964, %v1951, 0.0
        %v1971 = vadd.f32 %v1969, %v1970
        %v1972 = vsel %vm1964, %v1952, 0.0
        %v1973 = vadd.f32 %v1971, %v1972
        %v1974 = vsel %vm1964, %v1953, 0.0
        %v1975 = vadd.f32 %v1973, %v1974
        %v1976 = vsel %vm1964, %v1954, 0.0
        %v1977 = vadd.f32 %v1975, %v1976
        %v1978 = vsel %vm1964, %v1955, 0.0
        %v1979 = vadd.f32 %v1977, %v1978
        %v1980 = vsel %vm1964, %v1956, 0.0
        %v1981 = vadd.f32 %v1979, %v1980
        %v1982 = vsel %vm1964, %v1957, 0.0
        %v1983 = vadd.f32 %v1981, %v1982
        %v1984 = vsel %vm1964, %v1958, 0.0
        %v1985 = vadd.f32 %v1983, %v1984
        %v1986 = vsel %vm1964, %v1959, 0.0
        %v1987 = vadd.f32 %v1985, %v1986
        %v1988 = vsel %vm1964, %v1960, 0.0
        %v1989 = vadd.f32 %v1987, %v1988
        %v1990 = vsel %vm1964, %v1961, 0.0
        %v1991 = vadd.f32 %v1989, %v1990
        %v1992 = vsel %vm1964, %v1962, 0.0
        %v1993 = vadd.f32 %v1991, %v1992
        %v1994 = vsel %vm1964, %v1963, 0.0
        %v1995 = vadd.f32 %v1993, %v1994
        %v1996 = vrot.slane %v1995, 4
        %v1997 = vadd.f32 %v1995, %v1996
        %v1998 = vrot.slane %v1997, 2
        %v1999 = vadd.f32 %v1997, %v1998
        %v2000 = vrot.slane %v1999, 1
        %v2001 = vadd.f32 %v1999, %v2000
        %v2004 = vunpack.c.l.s4 1966171168
        %v2005 = vunpack.c.0.s8 %v2004
        %v2006 = vlaneseq
        %v2007 = vshrl.u32 %v2006, 7
        %v2008 = vsub.s32 %v2005, %v2007
        %v2009 = vrot.slane %v2001, %v2008
        %v2011 = vunpack.c.l.s4 1966171168
        %v2012 = vunpack.c.0.s8 %v2011
        %v2013 = vlaneseq
        %v2014 = vshrl.u32 %v2013, 7
        %v2015 = vsub.s32 %v2012, %v2014
        %v2016 = vrot.slane %v2009, %v2015
        %2017 = vrot.lane.b32.xlu0 %v2016, 118
        %v2018 = vpop.permute.xlu0 %2017
        %v2020 = vadd.f32 %v1947, %v2018
        %2021 = vst.msk [vmem:[#allocation5] sm:$0x1] %vm1728, %v2020
        %v2022 = vld [vmem:[#allocation6] sm:$0x1]
        %vm2023 = vcmask 113768
        %v2024 = vsel %vm2023, %v144, 0.0
        %v2025 = vsel %vm2023, %v145, 0.0
        %v2026 = vadd.f32 %v2024, %v2025
        %v2027 = vsel %vm2023, %v146, 0.0
        %v2028 = vadd.f32 %v2026, %v2027
        %v2029 = vsel %vm2023, %v147, 0.0
        %v2030 = vadd.f32 %v2028, %v2029
        %v2031 = vsel %vm2023, %v148, 0.0
        %v2032 = vadd.f32 %v2030, %v2031
        %v2033 = vsel %vm2023, %v149, 0.0
        %v2034 = vadd.f32 %v2032, %v2033
        %v2035 = vsel %vm2023, %v150, 0.0
        %v2036 = vadd.f32 %v2034, %v2035
        %v2037 = vsel %vm2023, %v151, 0.0
        %v2038 = vadd.f32 %v2036, %v2037
        %v2039 = vsel %vm2023, %v152, 0.0
        %v2040 = vadd.f32 %v2038, %v2039
        %v2041 = vsel %vm2023, %v153, 0.0
        %v2042 = vadd.f32 %v2040, %v2041
        %v2043 = vsel %vm2023, %v154, 0.0
        %v2044 = vadd.f32 %v2042, %v2043
        %v2045 = vsel %vm2023, %v155, 0.0
        %v2046 = vadd.f32 %v2044, %v2045
        %v2047 = vsel %vm2023, %v156, 0.0
        %v2048 = vadd.f32 %v2046, %v2047
        %v2049 = vsel %vm2023, %v157, 0.0
        %v2050 = vadd.f32 %v2048, %v2049
        %v2051 = vsel %vm2023, %v158, 0.0
        %v2052 = vadd.f32 %v2050, %v2051
        %v2053 = vsel %vm2023, %v159, 0.0
        %v2054 = vadd.f32 %v2052, %v2053
        %v2055 = vrot.slane %v2054, 4
        %v2056 = vadd.f32 %v2054, %v2055
        %v2057 = vrot.slane %v2056, 2
        %v2058 = vadd.f32 %v2056, %v2057
        %v2059 = vrot.slane %v2058, 1
        %v2060 = vadd.f32 %v2058, %v2059
        %v2063 = vunpack.c.l.s4 1966171168
        %v2064 = vunpack.c.0.s8 %v2063
        %v2065 = vlaneseq
        %v2066 = vshrl.u32 %v2065, 7
        %v2067 = vsub.s32 %v2064, %v2066
        %v2068 = vrot.slane %v2060, %v2067
        %v2070 = vunpack.c.l.s4 1966171168
        %v2071 = vunpack.c.0.s8 %v2070
        %v2072 = vlaneseq
        %v2073 = vshrl.u32 %v2072, 7
        %v2074 = vsub.s32 %v2071, %v2073
        %v2075 = vrot.slane %v2068, %v2074
        %2076 = vrot.lane.b32.xlu0 %v2075, 115
        %v2077 = vpop.permute.xlu0 %2076
        %v2079 = vadd.f32 %v2022, %v2077
        %vm2080 = vcmask 0
        %2081 = vst.msk [vmem:[#allocation6] sm:$0x1] %vm2080, %v2079
        %p2082 = scmp.eq.s32.totalorder %s14, 3
        // Predicated region
        $region33: #{tpu_custom_call.1} parent=27 // pred_check
          %p2083 = pneg %p2082
        $region34: #{tpu_custom_call.1} parent=27 // pred_check_branch
          %2085 = sbr.rel (%p2083) target = $region36
        $region35: #{tpu_custom_call.1} parent=27 // pred_region
          %v2086 = vld [vmem:[#allocation6] sm:$0x1]
          %v2087 = vadd.f32 %v2086, 0.0
          %s2088 = vtos %v2087
          %v2089 = vld [vmem:[#allocation2] sm:$0x1]
          %v2090 = vsel %vm1728, %v2089, 0.0
          %2091 = vadd.xlane.f32.xlu0 %v2090
          %v2092 = vpop.xlane.xlu0 %2091
          %v2093 = vrot.slane %v2092, 4
          %v2094 = vadd.f32 %v2092, %v2093
          %v2095 = vrot.slane %v2094, 2
          %v2096 = vadd.f32 %v2094, %v2095
          %v2097 = vrot.slane %v2096, 1
          %v2098 = vadd.f32 %v2096, %v2097
          %s2099 = vtos %v2098
          %s2100 = smul.f32 %s2088, 3.0
          %v2101 = vstv %s2100
          %v2102 = vrcp.pop %v2101
          %s2103 = vtos %v2102
          %s2104 = smul.f32 %s2099, %s2103
          %v2105 = vld [vmem:[#allocation4] sm:$0x1]
          %v2106 = vsel %vm1865, %v2105, 0.0
          %2107 = vadd.xlane.f32.xlu0 %v2106
          %v2108 = vpop.xlane.xlu0 %2107
          %v2109 = vrot.slane %v2108, 4
          %v2110 = vadd.f32 %v2108, %v2109
          %v2111 = vrot.slane %v2110, 2
          %v2112 = vadd.f32 %v2110, %v2111
          %v2113 = vrot.slane %v2112, 1
          %v2114 = vadd.f32 %v2112, %v2113
          %s2115 = vtos %v2114
          %v2116 = vrcp.pop 512.0
          %s2117 = vtos %v2116
          %s2118 = smul.f32 %s2115, %s2117
          %s2119 = smul.f32 %s2118, 0.5
          %s2120 = sadd.f32 %s2104, %s2119
          %v2121 = vld [vmem:[#allocation5] sm:$0x1]
          %v2122 = vsel %vm1728, %v2121, 0.0
          %2123 = vadd.xlane.f32.xlu0 %v2122
          %v2124 = vpop.xlane.xlu0 %2123
          %v2125 = vrot.slane %v2124, 4
          %v2126 = vadd.f32 %v2124, %v2125
          %v2127 = vrot.slane %v2126, 2
          %v2128 = vadd.f32 %v2126, %v2127
          %v2129 = vrot.slane %v2128, 1
          %v2130 = vadd.f32 %v2128, %v2129
          %s2131 = vtos %v2130
          %v2132 = vstv %s2100
          %v2133 = vrcp.pop %v2132
          %s2134 = vtos %v2133
          %s2135 = smul.f32 %s2131, %s2134
          %s2136 = smul.f32 %s2135, 0.25
          %s2137 = sadd.f32 %s2120, %s2136
          %vm2138 = vcmp.eq.s32.totalorder %v305, 0
          %v2139 = vstv %s2137
          %v2140 = vsel %vm2138, %v2139, 0.0
          %vm2141 = vcmp.eq.s32.totalorder %v305, 1
          %v2142 = vstv %s2118
          %v2143 = vsel %vm2141, %v2142, 0.0
          %v2144 = vadd.f32 %v2140, %v2143
          %vm2145 = vcmp.eq.s32.totalorder %v305, 2
          %v2146 = vstv %s2135
          %v2147 = vsel %vm2145, %v2146, 0.0
          %v2148 = vadd.f32 %v2144, %v2147
          %vm2149 = vcmp.eq.s32.totalorder %v305, 3
          %v2150 = vstv %s2104
          %v2151 = vsel %vm2149, %v2150, 0.0
          %v2152 = vadd.f32 %v2148, %v2151
          %vm2153 = vcmask 24576
          %2154 = vst.msk [vmem:[#allocation7] sm:$0x1] %vm2153, %v2152
        $region36: #{tpu_custom_call.1} parent=27 // pred_fallthru
          _
        // Predicated region
        $region37: #{tpu_custom_call.1} parent=27 // pred_check
          %p2155 = pneg %p74
        $region38: #{tpu_custom_call.1} parent=27 // pred_check_branch
          %2157 = sbr.rel (%p2155) target = $region40
        $region39: #{tpu_custom_call.1} parent=27 // pred_region
          %s2159 = ssub.s32 16, 16
          %2160 = vsyncadd [#allocation8], %s2159
          %s2162 = sshll.u32 [#allocation7], 4
          %s2163 = int_to_ptr.vmem [resolvable:$true] %s2162
          %2165 = dma.vmem_to_hbm [thread:$0]  %s2163, 16, %s2, [#allocation8]
        $region40: #{tpu_custom_call.1} parent=27 // pred_fallthru
          _
        // Predicated region
        $region41: #{tpu_custom_call.1} parent=27 // pred_check
          %p2166 = pneg %p74
        $region42: #{tpu_custom_call.1} parent=27 // pred_check_branch
          %2168 = sbr.rel (%p2166) target = $region44
        $region43: #{tpu_custom_call.1} parent=27 // pred_region
          %2169 = dma.done [#allocation8], 16
        $region44: #{tpu_custom_call.1} parent=27 // pred_fallthru
          _
      $region28: #{tpu_custom_call.1} parent=5 // pred_fallthru
        _
      %p2170 = scmp.le.s32.totalorder 2, %s9
      // Predicated region
      $region45: #{tpu_custom_call.1} parent=5 // pred_check
        %p2171 = pneg %p2170
      $region46: #{tpu_custom_call.1} parent=5 // pred_check_branch
        %2173 = sbr.rel (%p2171) target = $region48
      $region47: #{tpu_custom_call.1} parent=5 // pred_region
        %s2174 = ssub.s32 %s9, 2
      $region48: #{tpu_custom_call.1} parent=5 // pred_fallthru
        _
    $region6: #{tpu_custom_call.1} parent=1 // loop_footer
      %s13 = sadd.s32 1, %s9
    $region7: #{tpu_custom_call.1} parent=1 // loop_footer_branch
      %8 = sbr.rel target = $region3
    $region8: #{tpu_custom_call.1} parent=1 // loop_exit
      _
    %2175 = vsyncpa [#allocation8], 1
    %s2176 = scalar_lea.sflag [#allocation8], 1
    %2177 = vsyncpa %s2176, 1

</llo_original>
